<compile_context>
chip_gen: v6e
topology: v6e:2x2x1
jax: 0.10.0
libtpu: 0.0.40
codegen_flags: <defaults>
</compile_context>

<pallas_src>
import functools

import jax
import jax.numpy as jnp
from jax.experimental import pallas as pl
from jax.experimental.pallas import tpu as pltpu

# --- module configuration -----------------------------------------------------
K = (2, 3)               # (k_t, k_f)
C = 4                    # output channels
INTRA_CONNECT = "cat"    # -> in_channels = 2 * C
NORM_TYPE = "cLN"        # CumulativeLayerNorm2d
STRIDE = (1, 2)
EPS = 1e-5


# --- Pallas kernel -------------------------------------------------------------
def _deconv_unit_kernel(x_ref, w_ref, p_ref, o_ref, *, N, H, F):
    # x_ref: (Cin, N*H*F)      input with the freq axis pre-spread by stride 2 (zeros elsewhere),
    #                          batch-major along lanes: lane = n*H*F + h*F + f
    # w_ref: (KH*KW*Cout, Cin) fused ConvTranspose2d weight, rows ordered (kh, kw, cout)
    # p_ref: (Cout, 4)         per-channel params: [conv_bias, cLN gain, cLN bias, PReLU alpha]
    # o_ref: (Cout, N*H*F)     final module output (lane-dense slab)
    KH, KW = K
    Cout = C
    HF = H * F
    NH = N * H
    NHF = N * HF
    f32 = jnp.float32

    wf = w_ref[...]                       # (KH*KW*Cout, Cin)
    x = x_ref[...]                        # (Cin, NHF)
    bias_c = p_ref[:, 0:1]                # (Cout, 1) -> broadcasts along lanes
    gain_c = p_ref[:, 1:2]
    nbias_c = p_ref[:, 2:3]
    alpha_c = p_ref[:, 3:4]

    dn = (((1,), (0,)), ((), ()))

    # --- constant structure tensors (iota + compares/mults only, hoisted once) --
    # mask_t zeroes frame 0 of every batch segment: implements Chomp_T for the time tap
    # and stops it leaking across batch boundaries.
    lane = jax.lax.broadcasted_iota(jnp.int32, (1, NHF), 1)
    in_first = lane < F
    for n in range(1, N):
        in_first = in_first | ((lane >= n * HF) & (lane < n * HF + F))
    mask_t = 1.0 - in_first.astype(f32)                                   # (1, NHF)

    # cum_pool[q, g] = 1 iff lane q is in the same batch as global frame g and in a frame <= g
    # (causal prefix within the batch).  Frames are contiguous F-lane chunks, so
    # "frame(q) <= g" == "q < (g+1)*F" and "same batch" == "q >= batch_start(g)".
    q_i = jax.lax.broadcasted_iota(jnp.int32, (NHF, NH), 0)
    g_i = jax.lax.broadcasted_iota(jnp.int32, (NHF, NH), 1)
    bstart = jnp.zeros_like(g_i)
    for n in range(1, N):
        bstart = bstart + jnp.where(g_i >= n * H, HF, 0)
    cum_pool = ((q_i >= bstart) & (q_i < (g_i + 1) * F)).astype(f32)      # (NHF, NH)

    # spread[g, q] = 1 iff lane q belongs to global frame g  (stat broadcast back to lanes)
    g_j = jax.lax.broadcasted_iota(jnp.int32, (NH, NHF), 0)
    q_j = jax.lax.broadcasted_iota(jnp.int32, (NH, NHF), 1)
    spread = ((q_j >= g_j * F) & (q_j < (g_j + 1) * F)).astype(f32)       # (NH, NHF)

    # cumulative entry counts per global frame: ((h + 1) * Cout * F), h = frame-in-batch idx
    g_r = jax.lax.broadcasted_iota(jnp.int32, (1, NH), 1)
    h_r = g_r
    for n in range(1, N):
        h_r = h_r - jnp.where(g_r >= n * H, H, 0)
    inv_cnt = 1.0 / ((h_r.astype(f32) + 1.0) * float(Cout * F))           # (1, NH)

    def shift_right(v, s):
        # Zero-fill shift along the lane (minor) axis: out[:, j] = v[:, j - s], 0 for j < s.
        return jnp.concatenate([jnp.zeros((v.shape[0], s), f32), v[:, :NHF - s]], axis=1)

    # --- ConvTranspose2d: all 6 (kh, kw) taps, whole batch, in ONE MXU matmul ---
    taps = jax.lax.dot_general(wf, x, dn, preferred_element_type=f32)     # (KH*KW*Cout, NHF)
    # kh = 1 contributes one frame later (+F lanes); mask_t drops the Chomp_T'ed frame and
    # the cross-batch leak.
    ck = taps[:KW * Cout] + mask_t * shift_right(taps[KW * Cout:], F)     # (KW*Cout, NHF)
    # kw shifts the (stride-2 spread) freq axis by kw bins; lanes crossing frame/batch
    # boundaries are zero by construction, so no extra masking is needed.
    y = (ck[:Cout]
         + shift_right(ck[Cout:2 * Cout], 1)
         + shift_right(ck[2 * Cout:], 2))                                 # (Cout, NHF)
    y = y + bias_c

    # --- CumulativeLayerNorm2d: stats over (channel, freq), causal in time, per batch ---
    rows = jnp.concatenate([jnp.sum(y, axis=0, keepdims=True),
                            jnp.sum(y * y, axis=0, keepdims=True)], axis=0)          # (2, NHF)
    cums = jax.lax.dot_general(rows, cum_pool, dn, preferred_element_type=f32)       # (2, NH)
    cum1 = cums[0:1]
    cum2 = cums[1:2]
    mean = cum1 * inv_cnt
    var = (cum2 - 2.0 * mean * cum1) * inv_cnt + mean * mean
    inv_std = jax.lax.rsqrt(var + EPS)                                    # EUP, no divide
    stats = jnp.concatenate([mean, inv_std], axis=0)                      # (2, NH)
    stats_f = jax.lax.dot_general(stats, spread, dn, preferred_element_type=f32)     # (2, NHF)
    mean_f = stats_f[0:1]
    istd_f = stats_f[1:2]
    y = (y - mean_f) * (istd_f * gain_c) + nbias_c

    # --- PReLU (per-channel slope) ---
    y = jnp.where(y >= 0.0, y, alpha_c * y)

    o_ref[...] = y


# --- wrapper --------------------------------------------------------------------
@jax.jit
def deconv2d_unit(x_nchw, w, conv_bias, gain, nbias, alpha):
    """x_nchw: (N, 2C, T, Fin) float32 -> (N, C, T, 2*Fin + 1) float32."""
    N, Cin, H, W = x_nchw.shape
    KH, KW = K
    Cout = C
    F = STRIDE[1] * (W - 1) + KW          # 2W + 1 output frequency bins
    HF = H * F

    x = x_nchw.astype(jnp.float32)
    # Pre-spread the freq axis by the transposed-conv stride (input bin w -> lane 2w, rest 0),
    # so the in-kernel deconv is one fused matmul plus constant lane shifts.
    x_up = jnp.concatenate([x[..., None], jnp.zeros_like(x)[..., None]], axis=-1)
    x_up = x_up.reshape(N, Cin, H, 2 * W)
    x_up = jnp.pad(x_up, ((0, 0), (0, 0), (0, 0), (0, F - 2 * W)))        # (N, Cin, H, F)
    # Batch-major lane layout: (Cin, N*H*F) so the whole batch rides in one matmul.
    x_exp = jnp.transpose(x_up, (1, 0, 2, 3)).reshape(Cin, N * HF)

    # ConvTranspose2d weight (Cin, Cout, KH, KW) -> fused (KH*KW*Cout, Cin), rows (kh, kw, co).
    w_f = jnp.transpose(w.astype(jnp.float32), (2, 3, 1, 0)).reshape(KH * KW * Cout, Cin)
    # Single stacked parameter block: columns = [conv_bias, cLN gain, cLN bias, PReLU alpha].
    params = jnp.stack([conv_bias, gain, nbias, alpha], axis=1).astype(jnp.float32)  # (Cout, 4)

    out = pl.pallas_call(
        functools.partial(_deconv_unit_kernel, N=N, H=H, F=F),
        out_shape=jax.ShapeDtypeStruct((Cout, N * HF), jnp.float32),
        grid=(1,),
        in_specs=[
            pl.BlockSpec((Cin, N * HF), lambda i: (0, 0)),
            pl.BlockSpec((KH * KW * Cout, Cin), lambda i: (0, 0)),
            pl.BlockSpec((Cout, 4), lambda i: (0, 0)),
        ],
        out_specs=pl.BlockSpec((Cout, N * HF), lambda i: (0, 0)),
        compiler_params=pltpu.CompilerParams(dimension_semantics=("arbitrary",)),
    )(x_exp, w_f, params)

    # (Cout, N*H*F) -> (N, Cout, H, F); tiny metadata-level reshape + transpose in the wrapper.
    return jnp.transpose(out.reshape(Cout, N, H, F), (1, 0, 2, 3))


# --- pure-JAX reference (mirrors the PyTorch forward exactly) --------------------
def reference(x_nchw, w, conv_bias, gain, nbias, alpha):
    N, Cin, H, W = x_nchw.shape
    KH, KW = K
    Cout = C
    Hout = (H - 1) * STRIDE[0] + KH
    Wout = (W - 1) * STRIDE[1] + KW
    y = jnp.zeros((N, Cout, Hout, Wout), jnp.float32)
    for kh in range(KH):
        for kw in range(KW):
            contrib = jnp.einsum('nihw,io->nohw', x_nchw, w[:, :, kh, kw])
            y = y.at[:, :, kh:kh + H, kw:kw + STRIDE[1] * W:STRIDE[1]].add(contrib)
    y = y + conv_bias[None, :, None, None]
    y = y[:, :, :-(K[0] - 1), :]                       # Chomp_T(k_t - 1)
    # CumulativeLayerNorm2d
    _, Cc, T, F = y.shape
    step_sum = y.sum(axis=(1, 3), keepdims=True)
    step_pow = (y ** 2).sum(axis=(1, 3), keepdims=True)
    cum_sum = jnp.cumsum(step_sum, axis=2)
    cum_pow = jnp.cumsum(step_pow, axis=2)
    entry_cnt = (jnp.arange(1, T + 1, dtype=jnp.float32)
                 * (Cc * F)).reshape(1, 1, T, 1)
    cum_mean = cum_sum / entry_cnt
    cum_var = (cum_pow - 2 * cum_mean * cum_sum) / entry_cnt + cum_mean ** 2
    cum_std = jnp.sqrt(cum_var + EPS)
    y = (y - cum_mean) / cum_std
    y = y * gain.reshape(1, Cc, 1, 1) + nbias.reshape(1, Cc, 1, 1)
    # PReLU
    y = jnp.where(y >= 0, y, alpha.reshape(1, Cc, 1, 1) * y)
    return y


if __name__ == "__main__":
    key = jax.random.PRNGKey(0)
    N, H, W = 2, 8, 16
    Cin = 2 * C if INTRA_CONNECT == "cat" else C

    k1, k2, k3, k4, k5, k6 = jax.random.split(key, 6)
    x = jax.random.normal(k1, (N, Cin, H, W), jnp.float32)
    # ConvTranspose2d weight layout: (in_channels, out_channels, kH, kW)
    w = 0.1 * jax.random.normal(k2, (Cin, C, K[0], K[1]), jnp.float32)
    conv_bias = 0.1 * jax.random.normal(k3, (C,), jnp.float32)
    gain = 1.0 + 0.1 * jax.random.normal(k4, (C,), jnp.float32)      # cLN gain
    nbias = 0.1 * jax.random.normal(k5, (C,), jnp.float32)           # cLN bias
    alpha = 0.25 + 0.05 * jax.random.normal(k6, (C,), jnp.float32)   # PReLU slopes

    out = deconv2d_unit(x, w, conv_bias, gain, nbias, alpha)
    out = jax.block_until_ready(out)

    ref = reference(x, w, conv_bias, gain, nbias, alpha)
    assert out.shape == (N, C, H, STRIDE[1] * (W - 1) + K[1]), out.shape
    assert jnp.allclose(out, ref, atol=1e-4, rtol=1e-4), \
        float(jnp.max(jnp.abs(out - ref)))
    print("KERNEL_OK")
</pallas_src>

<mosaic_0001>
module attributes {stable_mosaic.version = 11 : i64} {
  func.func @_deconv_unit_kernel(%arg0: i32, %arg1: memref<8x528xf32, #tpu.memory_space<vmem>>, %arg2: memref<24x8xf32, #tpu.memory_space<vmem>>, %arg3: memref<4x4xf32, #tpu.memory_space<vmem>>, %arg4: memref<4x528xf32, #tpu.memory_space<vmem>>) attributes {dimension_semantics = [#tpu.dimension_semantics<arbitrary>], iteration_bounds = array<i64: 1>, scalar_prefetch = 0 : i64, scratch_operands = 0 : i64, tpu.core_type = #tpu.core_type<tc>, window_params = [{pipeline_mode = #tpu.pipeline_mode<synchronous>, transform_indices = @transform_0, window_bounds = array<i64: 8, 528>}, {pipeline_mode = #tpu.pipeline_mode<synchronous>, transform_indices = @transform_1, window_bounds = array<i64: 24, 8>}, {pipeline_mode = #tpu.pipeline_mode<synchronous>, transform_indices = @transform_2, window_bounds = array<i64: 4, 4>}, {pipeline_mode = #tpu.pipeline_mode<synchronous>, transform_indices = @transform_3, window_bounds = array<i64: 4, 528>}]} {
    %c0 = arith.constant 0 : index
    %c0_0 = arith.constant 0 : index
    %0 = vector.load %arg2[%c0, %c0_0] : memref<24x8xf32, #tpu.memory_space<vmem>>, vector<24x8xf32>
    %c0_1 = arith.constant 0 : index
    %c0_2 = arith.constant 0 : index
    %1 = vector.load %arg1[%c0_1, %c0_2] : memref<8x528xf32, #tpu.memory_space<vmem>>, vector<8x528xf32>
    %c0_3 = arith.constant 0 : index
    %c0_4 = arith.constant 0 : index
    %2 = vector.load %arg3[%c0_3, %c0_4] : memref<4x4xf32, #tpu.memory_space<vmem>>, vector<4x1xf32>
    %c0_5 = arith.constant 0 : index
    %c1 = arith.constant 1 : index
    %3 = vector.load %arg3[%c0_5, %c1] : memref<4x4xf32, #tpu.memory_space<vmem>>, vector<4x1xf32>
    %c0_6 = arith.constant 0 : index
    %c2 = arith.constant 2 : index
    %4 = vector.load %arg3[%c0_6, %c2] : memref<4x4xf32, #tpu.memory_space<vmem>>, vector<4x1xf32>
    %c0_7 = arith.constant 0 : index
    %c3 = arith.constant 3 : index
    %5 = vector.load %arg3[%c0_7, %c3] : memref<4x4xf32, #tpu.memory_space<vmem>>, vector<4x1xf32>
    %6 = tpu.iota {dimensions = array<i32: 1>} : vector<1x528xi32>
    %c33_i32 = arith.constant 33 : i32
    %7 = vector.broadcast %c33_i32 : i32 to vector<1x528xi32>
    %8 = arith.cmpi slt, %6, %7 : vector<1x528xi32>
    %c264_i32 = arith.constant 264 : i32
    %9 = vector.broadcast %c264_i32 : i32 to vector<1x528xi32>
    %10 = arith.cmpi sge, %6, %9 : vector<1x528xi32>
    %c297_i32 = arith.constant 297 : i32
    %11 = vector.broadcast %c297_i32 : i32 to vector<1x528xi32>
    %12 = arith.cmpi slt, %6, %11 : vector<1x528xi32>
    %13 = arith.andi %10, %12 : vector<1x528xi1>
    %14 = arith.ori %8, %13 : vector<1x528xi1>
    %15 = arith.extui %14 : vector<1x528xi1> to vector<1x528xi32>
    %16 = arith.sitofp %15 : vector<1x528xi32> to vector<1x528xf32>
    %cst = arith.constant 1.000000e+00 : f32
    %17 = vector.broadcast %cst : f32 to vector<1x528xf32>
    %18 = arith.subf %17, %16 : vector<1x528xf32>
    %19 = tpu.iota {dimensions = array<i32: 0>} : vector<528x16xi32>
    %20 = tpu.iota {dimensions = array<i32: 1>} : vector<528x16xi32>
    %c0_i32 = arith.constant 0 : i32
    %21 = vector.broadcast %c0_i32 : i32 to vector<528x16xi32>
    %c8_i32 = arith.constant 8 : i32
    %22 = vector.broadcast %c8_i32 : i32 to vector<528x16xi32>
    %23 = arith.cmpi sge, %20, %22 : vector<528x16xi32>
    %c264_i32_8 = arith.constant 264 : i32
    %c0_i32_9 = arith.constant 0 : i32
    %24 = vector.broadcast %c264_i32_8 : i32 to vector<528x16xi32>
    %25 = vector.broadcast %c0_i32_9 : i32 to vector<528x16xi32>
    %26 = arith.select %23, %24, %25 : vector<528x16xi1>, vector<528x16xi32>
    %27 = arith.addi %21, %26 : vector<528x16xi32>
    %28 = arith.cmpi sge, %19, %27 : vector<528x16xi32>
    %c1_i32 = arith.constant 1 : i32
    %29 = vector.broadcast %c1_i32 : i32 to vector<528x16xi32>
    %30 = arith.addi %20, %29 : vector<528x16xi32>
    %c33_i32_10 = arith.constant 33 : i32
    %31 = vector.broadcast %c33_i32_10 : i32 to vector<528x16xi32>
    %32 = arith.muli %30, %31 : vector<528x16xi32>
    %33 = arith.cmpi slt, %19, %32 : vector<528x16xi32>
    %34 = arith.andi %28, %33 : vector<528x16xi1>
    %35 = arith.extui %34 : vector<528x16xi1> to vector<528x16xi32>
    %36 = arith.sitofp %35 : vector<528x16xi32> to vector<528x16xf32>
    %37 = tpu.iota {dimensions = array<i32: 0>} : vector<16x528xi32>
    %38 = tpu.iota {dimensions = array<i32: 1>} : vector<16x528xi32>
    %c33_i32_11 = arith.constant 33 : i32
    %39 = vector.broadcast %c33_i32_11 : i32 to vector<16x528xi32>
    %40 = arith.muli %37, %39 : vector<16x528xi32>
    %41 = arith.cmpi sge, %38, %40 : vector<16x528xi32>
    %c1_i32_12 = arith.constant 1 : i32
    %42 = vector.broadcast %c1_i32_12 : i32 to vector<16x528xi32>
    %43 = arith.addi %37, %42 : vector<16x528xi32>
    %c33_i32_13 = arith.constant 33 : i32
    %44 = vector.broadcast %c33_i32_13 : i32 to vector<16x528xi32>
    %45 = arith.muli %43, %44 : vector<16x528xi32>
    %46 = arith.cmpi slt, %38, %45 : vector<16x528xi32>
    %47 = arith.andi %41, %46 : vector<16x528xi1>
    %48 = arith.extui %47 : vector<16x528xi1> to vector<16x528xi32>
    %49 = arith.sitofp %48 : vector<16x528xi32> to vector<16x528xf32>
    %50 = tpu.iota {dimensions = array<i32: 1>} : vector<1x16xi32>
    %c8_i32_14 = arith.constant 8 : i32
    %51 = vector.broadcast %c8_i32_14 : i32 to vector<1x16xi32>
    %52 = arith.cmpi sge, %50, %51 : vector<1x16xi32>
    %c8_i32_15 = arith.constant 8 : i32
    %c0_i32_16 = arith.constant 0 : i32
    %53 = vector.broadcast %c8_i32_15 : i32 to vector<1x16xi32>
    %54 = vector.broadcast %c0_i32_16 : i32 to vector<1x16xi32>
    %55 = arith.select %52, %53, %54 : vector<1x16xi1>, vector<1x16xi32>
    %56 = arith.subi %50, %55 : vector<1x16xi32>
    %57 = arith.sitofp %56 : vector<1x16xi32> to vector<1x16xf32>
    %cst_17 = arith.constant 1.000000e+00 : f32
    %58 = vector.broadcast %cst_17 : f32 to vector<1x16xf32>
    %59 = arith.addf %57, %58 : vector<1x16xf32>
    %cst_18 = arith.constant 1.320000e+02 : f32
    %60 = vector.broadcast %cst_18 : f32 to vector<1x16xf32>
    %61 = arith.mulf %59, %60 : vector<1x16xf32>
    %cst_19 = arith.constant 1.000000e+00 : f32
    %62 = vector.broadcast %cst_19 : f32 to vector<1x16xf32>
    %63 = arith.divf %62, %61 : vector<1x16xf32>
    %cst_20 = arith.constant dense<0.000000e+00> : vector<24x528xf32>
    %64 = tpu.matmul %0, %1, %cst_20 {dimension_numbers = #tpu.dot_dimension_numbers<[1], [0], [0], [1], [0, 0, 1, 1], [], []>} : vector<24x8xf32>, vector<8x528xf32>, vector<24x528xf32> -> vector<24x528xf32>
    %65 = vector.extract_strided_slice %64 {offsets = [0, 0], sizes = [12, 528], strides = [1, 1]} : vector<24x528xf32> to vector<12x528xf32>
    %66 = vector.extract_strided_slice %64 {offsets = [12, 0], sizes = [12, 528], strides = [1, 1]} : vector<24x528xf32> to vector<12x528xf32>
    %cst_21 = arith.constant 0.000000e+00 : f32
    %67 = vector.broadcast %cst_21 : f32 to vector<12x33xf32>
    %68 = vector.extract_strided_slice %66 {offsets = [0, 0], sizes = [12, 495], strides = [1, 1]} : vector<12x528xf32> to vector<12x495xf32>
    %69 = tpu.concatenate %67, %68 in 1 : vector<12x33xf32>, vector<12x495xf32> -> vector<12x528xf32>
    %70 = vector.broadcast %18 : vector<1x528xf32> to vector<12x528xf32>
    %71 = arith.mulf %70, %69 : vector<12x528xf32>
    %72 = arith.addf %65, %71 : vector<12x528xf32>
    %73 = vector.extract_strided_slice %72 {offsets = [0, 0], sizes = [4, 528], strides = [1, 1]} : vector<12x528xf32> to vector<4x528xf32>
    %74 = vector.extract_strided_slice %72 {offsets = [4, 0], sizes = [4, 528], strides = [1, 1]} : vector<12x528xf32> to vector<4x528xf32>
    %cst_22 = arith.constant 0.000000e+00 : f32
    %75 = vector.broadcast %cst_22 : f32 to vector<4x1xf32>
    %76 = vector.extract_strided_slice %74 {offsets = [0, 0], sizes = [4, 527], strides = [1, 1]} : vector<4x528xf32> to vector<4x527xf32>
    %77 = tpu.concatenate %75, %76 in 1 : vector<4x1xf32>, vector<4x527xf32> -> vector<4x528xf32>
    %78 = arith.addf %73, %77 : vector<4x528xf32>
    %79 = vector.extract_strided_slice %72 {offsets = [8, 0], sizes = [4, 528], strides = [1, 1]} : vector<12x528xf32> to vector<4x528xf32>
    %cst_23 = arith.constant 0.000000e+00 : f32
    %80 = vector.broadcast %cst_23 : f32 to vector<4x2xf32>
    %81 = vector.extract_strided_slice %79 {offsets = [0, 0], sizes = [4, 526], strides = [1, 1]} : vector<4x528xf32> to vector<4x526xf32>
    %82 = tpu.concatenate %80, %81 in 1 : vector<4x2xf32>, vector<4x526xf32> -> vector<4x528xf32>
    %83 = arith.addf %78, %82 : vector<4x528xf32>
    %84 = vector.broadcast %2 : vector<4x1xf32> to vector<4x528xf32>
    %85 = arith.addf %83, %84 : vector<4x528xf32>
    %cst_24 = arith.constant dense<0.000000e+00> : vector<528xf32>
    %86 = vector.multi_reduction <add>, %85, %cst_24 [0] : vector<4x528xf32> to vector<528xf32>
    %87 = vector.shape_cast %86 : vector<528xf32> to vector<1x528xf32>
    %88 = arith.mulf %85, %85 : vector<4x528xf32>
    %cst_25 = arith.constant dense<0.000000e+00> : vector<528xf32>
    %89 = vector.multi_reduction <add>, %88, %cst_25 [0] : vector<4x528xf32> to vector<528xf32>
    %90 = vector.shape_cast %89 : vector<528xf32> to vector<1x528xf32>
    %91 = tpu.concatenate %87, %90 in 0 : vector<1x528xf32>, vector<1x528xf32> -> vector<2x528xf32>
    %cst_26 = arith.constant dense<0.000000e+00> : vector<2x16xf32>
    %92 = tpu.matmul %91, %36, %cst_26 {dimension_numbers = #tpu.dot_dimension_numbers<[1], [0], [0], [1], [0, 0, 1, 1], [], []>} : vector<2x528xf32>, vector<528x16xf32>, vector<2x16xf32> -> vector<2x16xf32>
    %93 = vector.extract_strided_slice %92 {offsets = [0, 0], sizes = [1, 16], strides = [1, 1]} : vector<2x16xf32> to vector<1x16xf32>
    %94 = vector.extract_strided_slice %92 {offsets = [1, 0], sizes = [1, 16], strides = [1, 1]} : vector<2x16xf32> to vector<1x16xf32>
    %95 = arith.mulf %93, %63 : vector<1x16xf32>
    %cst_27 = arith.constant 2.000000e+00 : f32
    %96 = vector.broadcast %cst_27 : f32 to vector<1x16xf32>
    %97 = arith.mulf %96, %95 : vector<1x16xf32>
    %98 = arith.mulf %97, %93 : vector<1x16xf32>
    %99 = arith.subf %94, %98 : vector<1x16xf32>
    %100 = arith.mulf %99, %63 : vector<1x16xf32>
    %101 = arith.mulf %95, %95 : vector<1x16xf32>
    %102 = arith.addf %100, %101 : vector<1x16xf32>
    %cst_28 = arith.constant 9.99999974E-6 : f32
    %103 = vector.broadcast %cst_28 : f32 to vector<1x16xf32>
    %104 = arith.addf %102, %103 : vector<1x16xf32>
    %105 = math.rsqrt %104 : vector<1x16xf32>
    %106 = tpu.concatenate %95, %105 in 0 : vector<1x16xf32>, vector<1x16xf32> -> vector<2x16xf32>
    %cst_29 = arith.constant dense<0.000000e+00> : vector<2x528xf32>
    %107 = tpu.matmul %106, %49, %cst_29 {dimension_numbers = #tpu.dot_dimension_numbers<[1], [0], [0], [1], [0, 0, 1, 1], [], []>} : vector<2x16xf32>, vector<16x528xf32>, vector<2x528xf32> -> vector<2x528xf32>
    %108 = vector.extract_strided_slice %107 {offsets = [0, 0], sizes = [1, 528], strides = [1, 1]} : vector<2x528xf32> to vector<1x528xf32>
    %109 = vector.extract_strided_slice %107 {offsets = [1, 0], sizes = [1, 528], strides = [1, 1]} : vector<2x528xf32> to vector<1x528xf32>
    %110 = vector.broadcast %108 : vector<1x528xf32> to vector<4x528xf32>
    %111 = arith.subf %85, %110 : vector<4x528xf32>
    %112 = vector.broadcast %109 : vector<1x528xf32> to vector<4x528xf32>
    %113 = vector.broadcast %3 : vector<4x1xf32> to vector<4x528xf32>
    %114 = arith.mulf %112, %113 : vector<4x528xf32>
    %115 = arith.mulf %111, %114 : vector<4x528xf32>
    %116 = vector.broadcast %4 : vector<4x1xf32> to vector<4x528xf32>
    %117 = arith.addf %115, %116 : vector<4x528xf32>
    %cst_30 = arith.constant 0.000000e+00 : f32
    %118 = vector.broadcast %cst_30 : f32 to vector<4x528xf32>
    %119 = arith.cmpf oge, %117, %118 : vector<4x528xf32>
    %120 = vector.broadcast %5 : vector<4x1xf32> to vector<4x528xf32>
    %121 = arith.mulf %120, %117 : vector<4x528xf32>
    %122 = arith.select %119, %117, %121 : vector<4x528xi1>, vector<4x528xf32>
    %c0_31 = arith.constant 0 : index
    %c0_32 = arith.constant 0 : index
    %123 = vector.load %arg4[%c0_31, %c0_32] : memref<4x528xf32, #tpu.memory_space<vmem>>, vector<4x528xf32>
    tpu.vector_store %arg4[%c0_31, %c0_32], %122 {strides = array<i32>} : memref<4x528xf32, #tpu.memory_space<vmem>>, vector<4x528xf32>,
    return
  }
  func.func @transform_0(%arg0: i32) -> (i32, i32) {
    %c0_i32 = arith.constant 0 : i32
    %c0_i32_0 = arith.constant 0 : i32
    %c0_i32_1 = arith.constant 0 : i32
    return %c0_i32, %c0_i32_0 : i32, i32
  }
  func.func @transform_1(%arg0: i32) -> (i32, i32) {
    %c0_i32 = arith.constant 0 : i32
    %c0_i32_0 = arith.constant 0 : i32
    %c0_i32_1 = arith.constant 0 : i32
    return %c0_i32, %c0_i32_0 : i32, i32
  }
  func.func @transform_2(%arg0: i32) -> (i32, i32) {
    %c0_i32 = arith.constant 0 : i32
    %c0_i32_0 = arith.constant 0 : i32
    %c0_i32_1 = arith.constant 0 : i32
    return %c0_i32, %c0_i32_0 : i32, i32
  }
  func.func @transform_3(%arg0: i32) -> (i32, i32) {
    %c0_i32 = arith.constant 0 : i32
    %c0_i32_0 = arith.constant 0 : i32
    %c0_i32_1 = arith.constant 0 : i32
    return %c0_i32, %c0_i32_0 : i32, i32
  }
}

</mosaic_0001>

<llo_original>
// kernel: deconv2d_unit.1
$region0: #{deconv2d_unit.1}
  #allocation0 [shape = 'u32[]', space=smem, size = 0x4, offset = 0x4, fixed_abs, tag = 'smem constant byte address 0x4 - core index']
  #allocation1 [shape = 'u32[144,128]{1,0:T(1,128)}', space=vmem, size = 0x12000, scoped, tag = 'internal scratch']
  %s0 = inlined_call_operand.vmem [shape: f32[8,528], index: 0, kind: input, shape index: {}]
  %s1 = inlined_call_operand.vmem [shape: f32[24,8], index: 1, kind: input, shape index: {}]
  %s2 = inlined_call_operand.vmem [shape: f32[4,4], index: 2, kind: input, shape index: {}]
  %s3 = inlined_call_operand.vmem [shape: f32[4,528], index: 3, kind: output, shape index: {}]
  %s4 = sld [smem:[#allocation0]]
  $region22: #{deconv2d_unit.1} parent=0
    _
  %s6 = ssub.s32 1, %s4
  %s7 = scalar_select 0, %s6, %s4
  // Predicated region
  $region2: #{deconv2d_unit.1} parent=0 // pred_check
    _
  $region3: #{deconv2d_unit.1} parent=0 // pred_check_branch
    %9 = sbr.rel (0) target = $region5
  $region4: #{deconv2d_unit.1} parent=0 // pred_region
    _
  $region5: #{deconv2d_unit.1} parent=0 // pred_fallthru
    _
  // Predicated region
  $region6: #{deconv2d_unit.1} parent=0 // pred_check
    _
  $region7: #{deconv2d_unit.1} parent=0 // pred_check_branch
    %11 = sbr.rel (0) target = $region9
  $region8: #{deconv2d_unit.1} parent=0 // pred_region
    _
  $region9: #{deconv2d_unit.1} parent=0 // pred_fallthru
    _
  // Predicated region
  $region10: #{deconv2d_unit.1} parent=0 // pred_check
    _
  $region11: #{deconv2d_unit.1} parent=0 // pred_check_branch
    %13 = sbr.rel (0) target = $region13
  $region12: #{deconv2d_unit.1} parent=0 // pred_region
    _
  $region13: #{deconv2d_unit.1} parent=0 // pred_fallthru
    _
  %v14 = vld [vmem:[%s1] sm:$0xff]
  %v15 = vld [vmem:[%s1 + $0x8] sm:$0xff]
  %v16 = vld [vmem:[%s1 + $0x10] sm:$0xff]
  %v17 = vld [vmem:[%s0] sm:$0xff]
  %v18 = vld [vmem:[%s0 + $0x8] sm:$0xff]
  %v19 = vld [vmem:[%s0 + $0x10] sm:$0xff]
  %v20 = vld [vmem:[%s0 + $0x18] sm:$0xff]
  %v21 = vld [vmem:[%s0 + $0x20] sm:$0xff]
  %v22 = vld [vmem:[%s2] sm:$0xf]
  %v23 = vlaneseq
  %v24 = vand.u32 %v23, 127
  %v25 = vadd.s32 %v24, 128
  %v26 = vadd.s32 %v24, 256
  %v27 = vadd.s32 %v24, 384
  %v28 = vadd.s32 %v24, 512
  %vm29 = vcmp.lt.s32.totalorder %v24, 33
  %vm30 = vcmp.lt.s32.totalorder %v25, 33
  %vm31 = vcmp.lt.s32.totalorder %v26, 33
  %vm32 = vcmp.lt.s32.totalorder %v27, 33
  %vm33 = vcmp.lt.s32.totalorder %v28, 33
  %vm34 = vcmp.ge.s32.totalorder %v24, 264
  %vm35 = vcmp.ge.s32.totalorder %v25, 264
  %vm36 = vcmp.ge.s32.totalorder %v26, 264
  %vm37 = vcmp.ge.s32.totalorder %v27, 264
  %vm38 = vcmp.ge.s32.totalorder %v28, 264
  %vm39 = vcmp.lt.s32.totalorder %v24, 297
  %vm40 = vcmp.lt.s32.totalorder %v25, 297
  %vm41 = vcmp.lt.s32.totalorder %v26, 297
  %vm42 = vcmp.lt.s32.totalorder %v27, 297
  %vm43 = vcmp.lt.s32.totalorder %v28, 297
  %vm44 = vmand %vm34, %vm39
  %vm45 = vmand %vm35, %vm40
  %vm46 = vmand %vm36, %vm41
  %vm47 = vmand %vm37, %vm42
  %vm48 = vmand %vm38, %vm43
  %vm49 = vmor %vm29, %vm44
  %vm50 = vmor %vm30, %vm45
  %vm51 = vmor %vm31, %vm46
  %vm52 = vmor %vm32, %vm47
  %vm53 = vmor %vm33, %vm48
  %v54 = vsel %vm49, 1, 0
  %v55 = vsel %vm50, 1, 0
  %v56 = vsel %vm51, 1, 0
  %v57 = vsel %vm52, 1, 0
  %v58 = vsel %vm53, 1, 0
  %v59 = vcvt.s32.f32 %v54
  %v60 = vcvt.s32.f32 %v55
  %v61 = vcvt.s32.f32 %v56
  %v62 = vcvt.s32.f32 %v57
  %v63 = vcvt.s32.f32 %v58
  %v64 = vsub.f32 1.0, %v59
  %v65 = vsub.f32 1.0, %v60
  %v66 = vsub.f32 1.0, %v61
  %v67 = vsub.f32 1.0, %v62
  %v68 = vsub.f32 1.0, %v63
  %v69 = vlaneseq
  %v70 = vshrl.u32 %v69, 7
  %v71 = vadd.s32 %v70, 8
  %v72 = vadd.s32 %v70, 16
  %v73 = vadd.s32 %v70, 24
  %v74 = vadd.s32 %v70, 32
  %v75 = vadd.s32 %v70, 40
  %v76 = vadd.s32 %v70, 48
  %v77 = vadd.s32 %v70, 56
  %v78 = vadd.s32 %v70, 64
  %v79 = vadd.s32 %v70, 72
  %v80 = vadd.s32 %v70, 80
  %v81 = vadd.s32 %v70, 88
  %v82 = vadd.s32 %v70, 96
  %v83 = vadd.s32 %v70, 104
  %v84 = vadd.s32 %v70, 112
  %v85 = vadd.s32 %v70, 120
  %v86 = vadd.s32 %v70, 128
  %v87 = vadd.s32 %v70, 136
  %v88 = vadd.s32 %v70, 144
  %v89 = vadd.s32 %v70, 152
  %v90 = vadd.s32 %v70, 160
  %v91 = vadd.s32 %v70, 168
  %v92 = vadd.s32 %v70, 176
  %v93 = vadd.s32 %v70, 184
  %v94 = vadd.s32 %v70, 192
  %v95 = vadd.s32 %v70, 200
  %v96 = vadd.s32 %v70, 208
  %v97 = vadd.s32 %v70, 216
  %v98 = vadd.s32 %v70, 224
  %v99 = vadd.s32 %v70, 232
  %v100 = vadd.s32 %v70, 240
  %v101 = vadd.s32 %v70, 248
  %v102 = vadd.s32 %v70, 256
  %v103 = vadd.s32 %v70, 264
  %v104 = vadd.s32 %v70, 272
  %v105 = vadd.s32 %v70, 280
  %v106 = vadd.s32 %v70, 288
  %v107 = vadd.s32 %v70, 296
  %v108 = vadd.s32 %v70, 304
  %v109 = vadd.s32 %v70, 312
  %v110 = vadd.s32 %v70, 320
  %v111 = vadd.s32 %v70, 328
  %v112 = vadd.s32 %v70, 336
  %v113 = vadd.s32 %v70, 344
  %v114 = vadd.s32 %v70, 352
  %v115 = vadd.s32 %v70, 360
  %v116 = vadd.s32 %v70, 368
  %v117 = vadd.s32 %v70, 376
  %v118 = vadd.s32 %v70, 384
  %v119 = vadd.s32 %v70, 392
  %v120 = vadd.s32 %v70, 400
  %v121 = vadd.s32 %v70, 408
  %v122 = vadd.s32 %v70, 416
  %v123 = vadd.s32 %v70, 424
  %v124 = vadd.s32 %v70, 432
  %v125 = vadd.s32 %v70, 440
  %v126 = vadd.s32 %v70, 448
  %v127 = vadd.s32 %v70, 456
  %v128 = vadd.s32 %v70, 464
  %v129 = vadd.s32 %v70, 472
  %v130 = vadd.s32 %v70, 480
  %v131 = vadd.s32 %v70, 488
  %v132 = vadd.s32 %v70, 496
  %v133 = vadd.s32 %v70, 504
  %v134 = vadd.s32 %v70, 512
  %v135 = vadd.s32 %v70, 520
  %vm136 = vcmp.ge.s32.totalorder %v24, 8
  %v137 = vsel %vm136, 264, 0
  %vm138 = vcmp.ge.s32.totalorder %v70, %v137
  %vm139 = vcmp.ge.s32.totalorder %v71, %v137
  %vm140 = vcmp.ge.s32.totalorder %v72, %v137
  %vm141 = vcmp.ge.s32.totalorder %v73, %v137
  %vm142 = vcmp.ge.s32.totalorder %v74, %v137
  %vm143 = vcmp.ge.s32.totalorder %v75, %v137
  %vm144 = vcmp.ge.s32.totalorder %v76, %v137
  %vm145 = vcmp.ge.s32.totalorder %v77, %v137
  %vm146 = vcmp.ge.s32.totalorder %v78, %v137
  %vm147 = vcmp.ge.s32.totalorder %v79, %v137
  %vm148 = vcmp.ge.s32.totalorder %v80, %v137
  %vm149 = vcmp.ge.s32.totalorder %v81, %v137
  %vm150 = vcmp.ge.s32.totalorder %v82, %v137
  %vm151 = vcmp.ge.s32.totalorder %v83, %v137
  %vm152 = vcmp.ge.s32.totalorder %v84, %v137
  %vm153 = vcmp.ge.s32.totalorder %v85, %v137
  %vm154 = vcmp.ge.s32.totalorder %v86, %v137
  %vm155 = vcmp.ge.s32.totalorder %v87, %v137
  %vm156 = vcmp.ge.s32.totalorder %v88, %v137
  %vm157 = vcmp.ge.s32.totalorder %v89, %v137
  %vm158 = vcmp.ge.s32.totalorder %v90, %v137
  %vm159 = vcmp.ge.s32.totalorder %v91, %v137
  %vm160 = vcmp.ge.s32.totalorder %v92, %v137
  %vm161 = vcmp.ge.s32.totalorder %v93, %v137
  %vm162 = vcmp.ge.s32.totalorder %v94, %v137
  %vm163 = vcmp.ge.s32.totalorder %v95, %v137
  %vm164 = vcmp.ge.s32.totalorder %v96, %v137
  %vm165 = vcmp.ge.s32.totalorder %v97, %v137
  %vm166 = vcmp.ge.s32.totalorder %v98, %v137
  %vm167 = vcmp.ge.s32.totalorder %v99, %v137
  %vm168 = vcmp.ge.s32.totalorder %v100, %v137
  %vm169 = vcmp.ge.s32.totalorder %v101, %v137
  %vm170 = vcmp.ge.s32.totalorder %v102, %v137
  %vm171 = vcmp.ge.s32.totalorder %v103, %v137
  %vm172 = vcmp.ge.s32.totalorder %v104, %v137
  %vm173 = vcmp.ge.s32.totalorder %v105, %v137
  %vm174 = vcmp.ge.s32.totalorder %v106, %v137
  %vm175 = vcmp.ge.s32.totalorder %v107, %v137
  %vm176 = vcmp.ge.s32.totalorder %v108, %v137
  %vm177 = vcmp.ge.s32.totalorder %v109, %v137
  %vm178 = vcmp.ge.s32.totalorder %v110, %v137
  %vm179 = vcmp.ge.s32.totalorder %v111, %v137
  %vm180 = vcmp.ge.s32.totalorder %v112, %v137
  %vm181 = vcmp.ge.s32.totalorder %v113, %v137
  %vm182 = vcmp.ge.s32.totalorder %v114, %v137
  %vm183 = vcmp.ge.s32.totalorder %v115, %v137
  %vm184 = vcmp.ge.s32.totalorder %v116, %v137
  %vm185 = vcmp.ge.s32.totalorder %v117, %v137
  %vm186 = vcmp.ge.s32.totalorder %v118, %v137
  %vm187 = vcmp.ge.s32.totalorder %v119, %v137
  %vm188 = vcmp.ge.s32.totalorder %v120, %v137
  %vm189 = vcmp.ge.s32.totalorder %v121, %v137
  %vm190 = vcmp.ge.s32.totalorder %v122, %v137
  %vm191 = vcmp.ge.s32.totalorder %v123, %v137
  %vm192 = vcmp.ge.s32.totalorder %v124, %v137
  %vm193 = vcmp.ge.s32.totalorder %v125, %v137
  %vm194 = vcmp.ge.s32.totalorder %v126, %v137
  %vm195 = vcmp.ge.s32.totalorder %v127, %v137
  %vm196 = vcmp.ge.s32.totalorder %v128, %v137
  %vm197 = vcmp.ge.s32.totalorder %v129, %v137
  %vm198 = vcmp.ge.s32.totalorder %v130, %v137
  %vm199 = vcmp.ge.s32.totalorder %v131, %v137
  %vm200 = vcmp.ge.s32.totalorder %v132, %v137
  %vm201 = vcmp.ge.s32.totalorder %v133, %v137
  %vm202 = vcmp.ge.s32.totalorder %v134, %v137
  %vm203 = vcmp.ge.s32.totalorder %v135, %v137
  %v204 = vadd.s32 %v24, 1
  %v205 = vmul.u32 %v204, 33
  %vm206 = vcmp.lt.s32.totalorder %v70, %v205
  %vm207 = vcmp.lt.s32.totalorder %v71, %v205
  %vm208 = vcmp.lt.s32.totalorder %v72, %v205
  %vm209 = vcmp.lt.s32.totalorder %v73, %v205
  %vm210 = vcmp.lt.s32.totalorder %v74, %v205
  %vm211 = vcmp.lt.s32.totalorder %v75, %v205
  %vm212 = vcmp.lt.s32.totalorder %v76, %v205
  %vm213 = vcmp.lt.s32.totalorder %v77, %v205
  %vm214 = vcmp.lt.s32.totalorder %v78, %v205
  %vm215 = vcmp.lt.s32.totalorder %v79, %v205
  %vm216 = vcmp.lt.s32.totalorder %v80, %v205
  %vm217 = vcmp.lt.s32.totalorder %v81, %v205
  %vm218 = vcmp.lt.s32.totalorder %v82, %v205
  %vm219 = vcmp.lt.s32.totalorder %v83, %v205
  %vm220 = vcmp.lt.s32.totalorder %v84, %v205
  %vm221 = vcmp.lt.s32.totalorder %v85, %v205
  %vm222 = vcmp.lt.s32.totalorder %v86, %v205
  %vm223 = vcmp.lt.s32.totalorder %v87, %v205
  %vm224 = vcmp.lt.s32.totalorder %v88, %v205
  %vm225 = vcmp.lt.s32.totalorder %v89, %v205
  %vm226 = vcmp.lt.s32.totalorder %v90, %v205
  %vm227 = vcmp.lt.s32.totalorder %v91, %v205
  %vm228 = vcmp.lt.s32.totalorder %v92, %v205
  %vm229 = vcmp.lt.s32.totalorder %v93, %v205
  %vm230 = vcmp.lt.s32.totalorder %v94, %v205
  %vm231 = vcmp.lt.s32.totalorder %v95, %v205
  %vm232 = vcmp.lt.s32.totalorder %v96, %v205
  %vm233 = vcmp.lt.s32.totalorder %v97, %v205
  %vm234 = vcmp.lt.s32.totalorder %v98, %v205
  %vm235 = vcmp.lt.s32.totalorder %v99, %v205
  %vm236 = vcmp.lt.s32.totalorder %v100, %v205
  %vm237 = vcmp.lt.s32.totalorder %v101, %v205
  %vm238 = vcmp.lt.s32.totalorder %v102, %v205
  %vm239 = vcmp.lt.s32.totalorder %v103, %v205
  %vm240 = vcmp.lt.s32.totalorder %v104, %v205
  %vm241 = vcmp.lt.s32.totalorder %v105, %v205
  %vm242 = vcmp.lt.s32.totalorder %v106, %v205
  %vm243 = vcmp.lt.s32.totalorder %v107, %v205
  %vm244 = vcmp.lt.s32.totalorder %v108, %v205
  %vm245 = vcmp.lt.s32.totalorder %v109, %v205
  %vm246 = vcmp.lt.s32.totalorder %v110, %v205
  %vm247 = vcmp.lt.s32.totalorder %v111, %v205
  %vm248 = vcmp.lt.s32.totalorder %v112, %v205
  %vm249 = vcmp.lt.s32.totalorder %v113, %v205
  %vm250 = vcmp.lt.s32.totalorder %v114, %v205
  %vm251 = vcmp.lt.s32.totalorder %v115, %v205
  %vm252 = vcmp.lt.s32.totalorder %v116, %v205
  %vm253 = vcmp.lt.s32.totalorder %v117, %v205
  %vm254 = vcmp.lt.s32.totalorder %v118, %v205
  %vm255 = vcmp.lt.s32.totalorder %v119, %v205
  %vm256 = vcmp.lt.s32.totalorder %v120, %v205
  %vm257 = vcmp.lt.s32.totalorder %v121, %v205
  %vm258 = vcmp.lt.s32.totalorder %v122, %v205
  %vm259 = vcmp.lt.s32.totalorder %v123, %v205
  %vm260 = vcmp.lt.s32.totalorder %v124, %v205
  %vm261 = vcmp.lt.s32.totalorder %v125, %v205
  %vm262 = vcmp.lt.s32.totalorder %v126, %v205
  %vm263 = vcmp.lt.s32.totalorder %v127, %v205
  %vm264 = vcmp.lt.s32.totalorder %v128, %v205
  %vm265 = vcmp.lt.s32.totalorder %v129, %v205
  %vm266 = vcmp.lt.s32.totalorder %v130, %v205
  %vm267 = vcmp.lt.s32.totalorder %v131, %v205
  %vm268 = vcmp.lt.s32.totalorder %v132, %v205
  %vm269 = vcmp.lt.s32.totalorder %v133, %v205
  %vm270 = vcmp.lt.s32.totalorder %v134, %v205
  %vm271 = vcmp.lt.s32.totalorder %v135, %v205
  %vm272 = vmand %vm138, %vm206
  %vm273 = vmand %vm139, %vm207
  %vm274 = vmand %vm140, %vm208
  %vm275 = vmand %vm141, %vm209
  %vm276 = vmand %vm142, %vm210
  %vm277 = vmand %vm143, %vm211
  %vm278 = vmand %vm144, %vm212
  %vm279 = vmand %vm145, %vm213
  %vm280 = vmand %vm146, %vm214
  %vm281 = vmand %vm147, %vm215
  %vm282 = vmand %vm148, %vm216
  %vm283 = vmand %vm149, %vm217
  %vm284 = vmand %vm150, %vm218
  %vm285 = vmand %vm151, %vm219
  %vm286 = vmand %vm152, %vm220
  %vm287 = vmand %vm153, %vm221
  %vm288 = vmand %vm154, %vm222
  %vm289 = vmand %vm155, %vm223
  %vm290 = vmand %vm156, %vm224
  %vm291 = vmand %vm157, %vm225
  %vm292 = vmand %vm158, %vm226
  %vm293 = vmand %vm159, %vm227
  %vm294 = vmand %vm160, %vm228
  %vm295 = vmand %vm161, %vm229
  %vm296 = vmand %vm162, %vm230
  %vm297 = vmand %vm163, %vm231
  %vm298 = vmand %vm164, %vm232
  %vm299 = vmand %vm165, %vm233
  %vm300 = vmand %vm166, %vm234
  %vm301 = vmand %vm167, %vm235
  %vm302 = vmand %vm168, %vm236
  %vm303 = vmand %vm169, %vm237
  %vm304 = vmand %vm170, %vm238
  %vm305 = vmand %vm171, %vm239
  %vm306 = vmand %vm172, %vm240
  %vm307 = vmand %vm173, %vm241
  %vm308 = vmand %vm174, %vm242
  %vm309 = vmand %vm175, %vm243
  %vm310 = vmand %vm176, %vm244
  %vm311 = vmand %vm177, %vm245
  %vm312 = vmand %vm178, %vm246
  %vm313 = vmand %vm179, %vm247
  %vm314 = vmand %vm180, %vm248
  %vm315 = vmand %vm181, %vm249
  %vm316 = vmand %vm182, %vm250
  %vm317 = vmand %vm183, %vm251
  %vm318 = vmand %vm184, %vm252
  %vm319 = vmand %vm185, %vm253
  %vm320 = vmand %vm186, %vm254
  %vm321 = vmand %vm187, %vm255
  %vm322 = vmand %vm188, %vm256
  %vm323 = vmand %vm189, %vm257
  %vm324 = vmand %vm190, %vm258
  %vm325 = vmand %vm191, %vm259
  %vm326 = vmand %vm192, %vm260
  %vm327 = vmand %vm193, %vm261
  %vm328 = vmand %vm194, %vm262
  %vm329 = vmand %vm195, %vm263
  %vm330 = vmand %vm196, %vm264
  %vm331 = vmand %vm197, %vm265
  %vm332 = vmand %vm198, %vm266
  %vm333 = vmand %vm199, %vm267
  %vm334 = vmand %vm200, %vm268
  %vm335 = vmand %vm201, %vm269
  %vm336 = vmand %vm202, %vm270
  %vm337 = vmand %vm203, %vm271
  %v338 = vsel %vm272, 1, 0
  %v339 = vsel %vm273, 1, 0
  %v340 = vsel %vm274, 1, 0
  %v341 = vsel %vm275, 1, 0
  %v342 = vsel %vm276, 1, 0
  %v343 = vsel %vm277, 1, 0
  %v344 = vsel %vm278, 1, 0
  %v345 = vsel %vm279, 1, 0
  %v346 = vsel %vm280, 1, 0
  %v347 = vsel %vm281, 1, 0
  %v348 = vsel %vm282, 1, 0
  %v349 = vsel %vm283, 1, 0
  %v350 = vsel %vm284, 1, 0
  %v351 = vsel %vm285, 1, 0
  %v352 = vsel %vm286, 1, 0
  %v353 = vsel %vm287, 1, 0
  %v354 = vsel %vm288, 1, 0
  %v355 = vsel %vm289, 1, 0
  %v356 = vsel %vm290, 1, 0
  %v357 = vsel %vm291, 1, 0
  %v358 = vsel %vm292, 1, 0
  %v359 = vsel %vm293, 1, 0
  %v360 = vsel %vm294, 1, 0
  %v361 = vsel %vm295, 1, 0
  %v362 = vsel %vm296, 1, 0
  %v363 = vsel %vm297, 1, 0
  %v364 = vsel %vm298, 1, 0
  %v365 = vsel %vm299, 1, 0
  %v366 = vsel %vm300, 1, 0
  %v367 = vsel %vm301, 1, 0
  %v368 = vsel %vm302, 1, 0
  %v369 = vsel %vm303, 1, 0
  %v370 = vsel %vm304, 1, 0
  %v371 = vsel %vm305, 1, 0
  %v372 = vsel %vm306, 1, 0
  %v373 = vsel %vm307, 1, 0
  %v374 = vsel %vm308, 1, 0
  %v375 = vsel %vm309, 1, 0
  %v376 = vsel %vm310, 1, 0
  %v377 = vsel %vm311, 1, 0
  %v378 = vsel %vm312, 1, 0
  %v379 = vsel %vm313, 1, 0
  %v380 = vsel %vm314, 1, 0
  %v381 = vsel %vm315, 1, 0
  %v382 = vsel %vm316, 1, 0
  %v383 = vsel %vm317, 1, 0
  %v384 = vsel %vm318, 1, 0
  %v385 = vsel %vm319, 1, 0
  %v386 = vsel %vm320, 1, 0
  %v387 = vsel %vm321, 1, 0
  %v388 = vsel %vm322, 1, 0
  %v389 = vsel %vm323, 1, 0
  %v390 = vsel %vm324, 1, 0
  %v391 = vsel %vm325, 1, 0
  %v392 = vsel %vm326, 1, 0
  %v393 = vsel %vm327, 1, 0
  %v394 = vsel %vm328, 1, 0
  %v395 = vsel %vm329, 1, 0
  %v396 = vsel %vm330, 1, 0
  %v397 = vsel %vm331, 1, 0
  %v398 = vsel %vm332, 1, 0
  %v399 = vsel %vm333, 1, 0
  %v400 = vsel %vm334, 1, 0
  %v401 = vsel %vm335, 1, 0
  %v402 = vsel %vm336, 1, 0
  %v403 = vsel %vm337, 1, 0
  %v404 = vcvt.s32.f32 %v338
  %v405 = vcvt.s32.f32 %v339
  %v406 = vcvt.s32.f32 %v340
  %v407 = vcvt.s32.f32 %v341
  %v408 = vcvt.s32.f32 %v342
  %v409 = vcvt.s32.f32 %v343
  %v410 = vcvt.s32.f32 %v344
  %v411 = vcvt.s32.f32 %v345
  %v412 = vcvt.s32.f32 %v346
  %v413 = vcvt.s32.f32 %v347
  %v414 = vcvt.s32.f32 %v348
  %v415 = vcvt.s32.f32 %v349
  %v416 = vcvt.s32.f32 %v350
  %v417 = vcvt.s32.f32 %v351
  %v418 = vcvt.s32.f32 %v352
  %v419 = vcvt.s32.f32 %v353
  %v420 = vcvt.s32.f32 %v354
  %v421 = vcvt.s32.f32 %v355
  %v422 = vcvt.s32.f32 %v356
  %v423 = vcvt.s32.f32 %v357
  %v424 = vcvt.s32.f32 %v358
  %v425 = vcvt.s32.f32 %v359
  %v426 = vcvt.s32.f32 %v360
  %v427 = vcvt.s32.f32 %v361
  %v428 = vcvt.s32.f32 %v362
  %v429 = vcvt.s32.f32 %v363
  %v430 = vcvt.s32.f32 %v364
  %v431 = vcvt.s32.f32 %v365
  %v432 = vcvt.s32.f32 %v366
  %v433 = vcvt.s32.f32 %v367
  %v434 = vcvt.s32.f32 %v368
  %v435 = vcvt.s32.f32 %v369
  %v436 = vcvt.s32.f32 %v370
  %v437 = vcvt.s32.f32 %v371
  %v438 = vcvt.s32.f32 %v372
  %v439 = vcvt.s32.f32 %v373
  %v440 = vcvt.s32.f32 %v374
  %v441 = vcvt.s32.f32 %v375
  %v442 = vcvt.s32.f32 %v376
  %v443 = vcvt.s32.f32 %v377
  %v444 = vcvt.s32.f32 %v378
  %v445 = vcvt.s32.f32 %v379
  %v446 = vcvt.s32.f32 %v380
  %v447 = vcvt.s32.f32 %v381
  %v448 = vcvt.s32.f32 %v382
  %v449 = vcvt.s32.f32 %v383
  %v450 = vcvt.s32.f32 %v384
  %v451 = vcvt.s32.f32 %v385
  %v452 = vcvt.s32.f32 %v386
  %v453 = vcvt.s32.f32 %v387
  %v454 = vcvt.s32.f32 %v388
  %v455 = vcvt.s32.f32 %v389
  %v456 = vcvt.s32.f32 %v390
  %v457 = vcvt.s32.f32 %v391
  %v458 = vcvt.s32.f32 %v392
  %v459 = vcvt.s32.f32 %v393
  %v460 = vcvt.s32.f32 %v394
  %v461 = vcvt.s32.f32 %v395
  %v462 = vcvt.s32.f32 %v396
  %v463 = vcvt.s32.f32 %v397
  %v464 = vcvt.s32.f32 %v398
  %v465 = vcvt.s32.f32 %v399
  %v466 = vcvt.s32.f32 %v400
  %v467 = vcvt.s32.f32 %v401
  %v468 = vcvt.s32.f32 %v402
  %v469 = vcvt.s32.f32 %v403
  %v470 = vmul.u32 %v70, 33
  %v471 = vmul.u32 %v71, 33
  %vm472 = vcmp.ge.s32.totalorder %v24, %v470
  %vm473 = vcmp.ge.s32.totalorder %v25, %v470
  %vm474 = vcmp.ge.s32.totalorder %v26, %v470
  %vm475 = vcmp.ge.s32.totalorder %v27, %v470
  %vm476 = vcmp.ge.s32.totalorder %v28, %v470
  %vm477 = vcmp.ge.s32.totalorder %v24, %v471
  %vm478 = vcmp.ge.s32.totalorder %v25, %v471
  %vm479 = vcmp.ge.s32.totalorder %v26, %v471
  %vm480 = vcmp.ge.s32.totalorder %v27, %v471
  %vm481 = vcmp.ge.s32.totalorder %v28, %v471
  %v482 = vadd.s32 %v70, 1
  %v483 = vadd.s32 %v71, 1
  %v484 = vmul.u32 %v482, 33
  %v485 = vmul.u32 %v483, 33
  %vm486 = vcmp.lt.s32.totalorder %v24, %v484
  %vm487 = vcmp.lt.s32.totalorder %v25, %v484
  %vm488 = vcmp.lt.s32.totalorder %v26, %v484
  %vm489 = vcmp.lt.s32.totalorder %v27, %v484
  %vm490 = vcmp.lt.s32.totalorder %v28, %v484
  %vm491 = vcmp.lt.s32.totalorder %v24, %v485
  %vm492 = vcmp.lt.s32.totalorder %v25, %v485
  %vm493 = vcmp.lt.s32.totalorder %v26, %v485
  %vm494 = vcmp.lt.s32.totalorder %v27, %v485
  %vm495 = vcmp.lt.s32.totalorder %v28, %v485
  %vm496 = vmand %vm472, %vm486
  %vm497 = vmand %vm473, %vm487
  %vm498 = vmand %vm474, %vm488
  %vm499 = vmand %vm475, %vm489
  %vm500 = vmand %vm476, %vm490
  %vm501 = vmand %vm477, %vm491
  %vm502 = vmand %vm478, %vm492
  %vm503 = vmand %vm479, %vm493
  %vm504 = vmand %vm480, %vm494
  %vm505 = vmand %vm481, %vm495
  %v506 = vsel %vm496, 1, 0
  %v507 = vsel %vm497, 1, 0
  %v508 = vsel %vm498, 1, 0
  %v509 = vsel %vm499, 1, 0
  %v510 = vsel %vm500, 1, 0
  %v511 = vsel %vm501, 1, 0
  %v512 = vsel %vm502, 1, 0
  %v513 = vsel %vm503, 1, 0
  %v514 = vsel %vm504, 1, 0
  %v515 = vsel %vm505, 1, 0
  %v516 = vcvt.s32.f32 %v506
  %v517 = vcvt.s32.f32 %v507
  %v518 = vcvt.s32.f32 %v508
  %v519 = vcvt.s32.f32 %v509
  %v520 = vcvt.s32.f32 %v510
  %v521 = vcvt.s32.f32 %v511
  %v522 = vcvt.s32.f32 %v512
  %v523 = vcvt.s32.f32 %v513
  %v524 = vcvt.s32.f32 %v514
  %v525 = vcvt.s32.f32 %v515
  %v526 = vsel %vm136, 8, 0
  %v527 = vsub.s32 %v24, %v526
  %v528 = vcvt.s32.f32 %v527
  %v529 = vadd.f32 %v528, 1.0
  %v530 = vmul.f32 %v529, 132.0
  %v531 = vrcp.pop %v530
  %v532 = vmul.f32 1.0, %v531
  %vm533 = vcmask 64512
  %v535 = vsel %vm533, %v14, 0
  %v538 = vsel %vm533, %v15, 0
  %v541 = vsel %vm533, %v16, 0
  %543 = vmatprep.subr.mxu0 0.0
  %544 = vmatpush1.msra.mxu0 0.0
  %545 = vmatprep.subr.mxu0 0.0
  %546 = vmatpush1.msra.mxu0 0.0
  %547 = vmatprep.subr.mxu0 0.0
  %548 = vmatpush1.msra.mxu0 0.0
  %549 = vmatprep.subr.mxu0 0.0
  %550 = vmatpush1.msra.mxu0 0.0
  %551 = vmatprep.subr.mxu0 0.0
  %552 = vmatpush1.msra.mxu0 0.0
  %553 = vmatprep.subr.mxu0 0.0
  %554 = vmatpush1.msra.mxu0 0.0
  %555 = vmatprep.subr.mxu0 0.0
  %556 = vmatpush1.msra.mxu0 0.0
  %557 = vmatprep.subr.mxu0 0.0
  %558 = vmatpush1.msra.mxu0 0.0
  %559 = vmatprep.subr.mxu0 0.0
  %560 = vmatpush1.msra.mxu0 0.0
  %561 = vmatprep.subr.mxu0 0.0
  %562 = vmatpush1.msra.mxu0 0.0
  %563 = vmatprep.subr.mxu0 0.0
  %564 = vmatpush1.msra.mxu0 0.0
  %565 = vmatprep.subr.mxu0 0.0
  %566 = vmatpush1.msra.mxu0 0.0
  %567 = vmatprep.subr.mxu0 0.0
  %568 = vmatpush1.msra.mxu0 0.0
  %569 = vmatprep.subr.mxu0 0.0
  %570 = vmatpush1.msra.mxu0 0.0
  %571 = vmatprep.subr.mxu0 0.0
  %572 = vmatpush1.msra.mxu0 0.0
  %573 = vmatprep.subr.mxu0 %v18
  %574 = vmatpush1.msra.mxu0 %v17
  %575 = vmatprep.subr.mxu0 0.0
  %576 = vmatpush2.msra.mxu0 0.0
  %577 = vmatprep.subr.mxu0 0.0
  %578 = vmatpush2.msra.mxu0 0.0
  %579 = vmatprep.subr.mxu0 0.0
  %580 = vmatpush2.msra.mxu0 0.0
  %581 = vmatprep.subr.mxu0 0.0
  %582 = vmatpush2.msra.mxu0 0.0
  %583 = vmatprep.subr.mxu0 0.0
  %584 = vmatpush2.msra.mxu0 0.0
  %585 = vmatprep.subr.mxu0 0.0
  %586 = vmatpush2.msra.mxu0 0.0
  %587 = vmatprep.subr.mxu0 0.0
  %588 = vmatpush2.msra.mxu0 0.0
  %589 = vmatprep.subr.mxu0 0.0
  %590 = vmatpush2.msra.mxu0 0.0
  %591 = vmatprep.subr.mxu0 0.0
  %592 = vmatpush2.msra.mxu0 0.0
  %593 = vmatprep.subr.mxu0 0.0
  %594 = vmatpush2.msra.mxu0 0.0
  %595 = vmatprep.subr.mxu0 0.0
  %596 = vmatpush2.msra.mxu0 0.0
  %597 = vmatprep.subr.mxu0 0.0
  %598 = vmatpush2.msra.mxu0 0.0
  %599 = vmatprep.subr.mxu0 0.0
  %600 = vmatpush2.msra.mxu0 0.0
  %601 = vmatprep.subr.mxu0 0.0
  %602 = vmatpush2.msra.mxu0 0.0
  %603 = vmatprep.subr.mxu0 0.0
  %604 = vmatpush2.msra.mxu0 0.0
  %605 = vmatprep.subr.mxu0 0.0
  %606 = vmatpush2.msra.mxu0 0.0
  %607 = vmatprep.mubr.f32.mxu0 0.0
  %608 = vmatmul.mubr.f32.gmra.mxu0 %v535
  %v609 = vpop.f32.mrf.mxu0
  %v610 = vadd.f32 0.0, %v609
  %v611 = vpop.f32.mrf.mxu0
  %v612 = vadd.f32 0.0, %v611
  %613 = vmatprep.mubr.f32.mxu0 0.0
  %614 = vmatmul.mubr.f32.gmra.mxu0 %v538
  %v615 = vpop.f32.mrf.mxu0
  %v616 = vadd.f32 0.0, %v615
  %v617 = vpop.f32.mrf.mxu0
  %v618 = vadd.f32 0.0, %v617
  %619 = vmatprep.mubr.f32.mxu0 0.0
  %620 = vmatmul.mubr.f32.gmra.mxu0 %v541
  %v621 = vpop.f32.mrf.mxu0
  %v622 = vadd.f32 0.0, %v621
  %v623 = vpop.f32.mrf.mxu0
  %v624 = vadd.f32 0.0, %v623
  %625 = vdwg.mxu0
  %626 = vmatprep.subr.mxu0 0.0
  %627 = vmatpush1.msra.mxu0 0.0
  %628 = vmatprep.subr.mxu0 0.0
  %629 = vmatpush1.msra.mxu0 0.0
  %630 = vmatprep.subr.mxu0 0.0
  %631 = vmatpush1.msra.mxu0 0.0
  %632 = vmatprep.subr.mxu0 0.0
  %633 = vmatpush1.msra.mxu0 0.0
  %634 = vmatprep.subr.mxu0 0.0
  %635 = vmatpush1.msra.mxu0 0.0
  %636 = vmatprep.subr.mxu0 0.0
  %637 = vmatpush1.msra.mxu0 0.0
  %638 = vmatprep.subr.mxu0 0.0
  %639 = vmatpush1.msra.mxu0 0.0
  %640 = vmatprep.subr.mxu0 0.0
  %641 = vmatpush1.msra.mxu0 0.0
  %642 = vmatprep.subr.mxu0 0.0
  %643 = vmatpush1.msra.mxu0 0.0
  %644 = vmatprep.subr.mxu0 0.0
  %645 = vmatpush1.msra.mxu0 0.0
  %646 = vmatprep.subr.mxu0 0.0
  %647 = vmatpush1.msra.mxu0 0.0
  %648 = vmatprep.subr.mxu0 0.0
  %649 = vmatpush1.msra.mxu0 0.0
  %650 = vmatprep.subr.mxu0 0.0
  %651 = vmatpush1.msra.mxu0 0.0
  %652 = vmatprep.subr.mxu0 0.0
  %653 = vmatpush1.msra.mxu0 0.0
  %654 = vmatprep.subr.mxu0 0.0
  %655 = vmatpush1.msra.mxu0 0.0
  %656 = vmatprep.subr.mxu0 %v20
  %657 = vmatpush1.msra.mxu0 %v19
  %658 = vmatprep.subr.mxu0 0.0
  %659 = vmatpush2.msra.mxu0 0.0
  %660 = vmatprep.subr.mxu0 0.0
  %661 = vmatpush2.msra.mxu0 0.0
  %662 = vmatprep.subr.mxu0 0.0
  %663 = vmatpush2.msra.mxu0 0.0
  %664 = vmatprep.subr.mxu0 0.0
  %665 = vmatpush2.msra.mxu0 0.0
  %666 = vmatprep.subr.mxu0 0.0
  %667 = vmatpush2.msra.mxu0 0.0
  %668 = vmatprep.subr.mxu0 0.0
  %669 = vmatpush2.msra.mxu0 0.0
  %670 = vmatprep.subr.mxu0 0.0
  %671 = vmatpush2.msra.mxu0 0.0
  %672 = vmatprep.subr.mxu0 0.0
  %673 = vmatpush2.msra.mxu0 0.0
  %674 = vmatprep.subr.mxu0 0.0
  %675 = vmatpush2.msra.mxu0 0.0
  %676 = vmatprep.subr.mxu0 0.0
  %677 = vmatpush2.msra.mxu0 0.0
  %678 = vmatprep.subr.mxu0 0.0
  %679 = vmatpush2.msra.mxu0 0.0
  %680 = vmatprep.subr.mxu0 0.0
  %681 = vmatpush2.msra.mxu0 0.0
  %682 = vmatprep.subr.mxu0 0.0
  %683 = vmatpush2.msra.mxu0 0.0
  %684 = vmatprep.subr.mxu0 0.0
  %685 = vmatpush2.msra.mxu0 0.0
  %686 = vmatprep.subr.mxu0 0.0
  %687 = vmatpush2.msra.mxu0 0.0
  %688 = vmatprep.subr.mxu0 0.0
  %689 = vmatpush2.msra.mxu0 0.0
  %690 = vmatprep.mubr.f32.mxu0 0.0
  %691 = vmatmul.mubr.f32.gmra.mxu0 %v535
  %v692 = vpop.f32.mrf.mxu0
  %v693 = vadd.f32 0.0, %v692
  %v694 = vpop.f32.mrf.mxu0
  %v695 = vadd.f32 0.0, %v694
  %696 = vmatprep.mubr.f32.mxu0 0.0
  %697 = vmatmul.mubr.f32.gmra.mxu0 %v538
  %v698 = vpop.f32.mrf.mxu0
  %v699 = vadd.f32 0.0, %v698
  %v700 = vpop.f32.mrf.mxu0
  %v701 = vadd.f32 0.0, %v700
  %702 = vmatprep.mubr.f32.mxu0 0.0
  %703 = vmatmul.mubr.f32.gmra.mxu0 %v541
  %v704 = vpop.f32.mrf.mxu0
  %v705 = vadd.f32 0.0, %v704
  %v706 = vpop.f32.mrf.mxu0
  %v707 = vadd.f32 0.0, %v706
  %708 = vdwg.mxu0
  %709 = vmatprep.subr.mxu0 0.0
  %710 = vmatpush1.msra.mxu0 0.0
  %711 = vmatprep.subr.mxu0 0.0
  %712 = vmatpush1.msra.mxu0 0.0
  %713 = vmatprep.subr.mxu0 0.0
  %714 = vmatpush1.msra.mxu0 0.0
  %715 = vmatprep.subr.mxu0 0.0
  %716 = vmatpush1.msra.mxu0 0.0
  %717 = vmatprep.subr.mxu0 0.0
  %718 = vmatpush1.msra.mxu0 0.0
  %719 = vmatprep.subr.mxu0 0.0
  %720 = vmatpush1.msra.mxu0 0.0
  %721 = vmatprep.subr.mxu0 0.0
  %722 = vmatpush1.msra.mxu0 0.0
  %723 = vmatprep.subr.mxu0 0.0
  %724 = vmatpush1.msra.mxu0 0.0
  %725 = vmatprep.subr.mxu0 0.0
  %726 = vmatpush1.msra.mxu0 0.0
  %727 = vmatprep.subr.mxu0 0.0
  %728 = vmatpush1.msra.mxu0 0.0
  %729 = vmatprep.subr.mxu0 0.0
  %730 = vmatpush1.msra.mxu0 0.0
  %731 = vmatprep.subr.mxu0 0.0
  %732 = vmatpush1.msra.mxu0 0.0
  %733 = vmatprep.subr.mxu0 0.0
  %734 = vmatpush1.msra.mxu0 0.0
  %735 = vmatprep.subr.mxu0 0.0
  %736 = vmatpush1.msra.mxu0 0.0
  %737 = vmatprep.subr.mxu0 0.0
  %738 = vmatpush1.msra.mxu0 0.0
  %739 = vmatprep.subr.mxu0 0.0
  %740 = vmatpush1.msra.mxu0 %v21
  %741 = vmatprep.subr.mxu0 0.0
  %742 = vmatpush2.msra.mxu0 0.0
  %743 = vmatprep.subr.mxu0 0.0
  %744 = vmatpush2.msra.mxu0 0.0
  %745 = vmatprep.subr.mxu0 0.0
  %746 = vmatpush2.msra.mxu0 0.0
  %747 = vmatprep.subr.mxu0 0.0
  %748 = vmatpush2.msra.mxu0 0.0
  %749 = vmatprep.subr.mxu0 0.0
  %750 = vmatpush2.msra.mxu0 0.0
  %751 = vmatprep.subr.mxu0 0.0
  %752 = vmatpush2.msra.mxu0 0.0
  %753 = vmatprep.subr.mxu0 0.0
  %754 = vmatpush2.msra.mxu0 0.0
  %755 = vmatprep.subr.mxu0 0.0
  %756 = vmatpush2.msra.mxu0 0.0
  %757 = vmatprep.subr.mxu0 0.0
  %758 = vmatpush2.msra.mxu0 0.0
  %759 = vmatprep.subr.mxu0 0.0
  %760 = vmatpush2.msra.mxu0 0.0
  %761 = vmatprep.subr.mxu0 0.0
  %762 = vmatpush2.msra.mxu0 0.0
  %763 = vmatprep.subr.mxu0 0.0
  %764 = vmatpush2.msra.mxu0 0.0
  %765 = vmatprep.subr.mxu0 0.0
  %766 = vmatpush2.msra.mxu0 0.0
  %767 = vmatprep.subr.mxu0 0.0
  %768 = vmatpush2.msra.mxu0 0.0
  %769 = vmatprep.subr.mxu0 0.0
  %770 = vmatpush2.msra.mxu0 0.0
  %771 = vmatprep.subr.mxu0 0.0
  %772 = vmatpush2.msra.mxu0 0.0
  %773 = vmatprep.mubr.f32.mxu0 0.0
  %774 = vmatmul.mubr.f32.gmra.mxu0 %v535
  %v775 = vpop.f32.mrf.mxu0
  %v776 = vadd.f32 0.0, %v775
  %v777 = vpop.f32.mrf.mxu0
  %778 = vmatprep.mubr.f32.mxu0 0.0
  %779 = vmatmul.mubr.f32.gmra.mxu0 %v538
  %v780 = vpop.f32.mrf.mxu0
  %v781 = vadd.f32 0.0, %v780
  %v782 = vpop.f32.mrf.mxu0
  %783 = vmatprep.mubr.f32.mxu0 0.0
  %784 = vmatmul.mubr.f32.gmra.mxu0 %v541
  %v785 = vpop.f32.mrf.mxu0
  %v786 = vpop.f32.mrf.mxu0
  %787 = vdwg.mxu0
  %vm796 = vcmask 1043456
  %v797 = vrot.slane %v616, 4
  %v798 = vrot.slane %v622, 4
  %v799 = vsel %vm796, %v797, %v798
  %v800 = vrot.slane %v618, 4
  %v801 = vrot.slane %v624, 4
  %v802 = vsel %vm796, %v800, %v801
  %v803 = vrot.slane %v699, 4
  %v804 = vrot.slane %v705, 4
  %v805 = vsel %vm796, %v803, %v804
  %v806 = vrot.slane %v701, 4
  %v807 = vrot.slane %v707, 4
  %v808 = vsel %vm796, %v806, %v807
  %809 = vrot.lane.b32.xlu0 %v799, 33
  %v810 = vpop.permute.xlu0 %809
  %811 = vrot.lane.b32.xlu0 %v802, 33
  %v812 = vpop.permute.xlu0 %811
  %813 = vrot.lane.b32.xlu0 %v805, 33
  %v814 = vpop.permute.xlu0 %813
  %815 = vrot.lane.b32.xlu0 %v808, 33
  %v816 = vpop.permute.xlu0 %815
  %817 = vrot.lane.b32.xlu0 %v798, 33
  %v818 = vpop.permute.xlu0 %817
  %819 = vrot.lane.b32.xlu0 %v801, 33
  %v820 = vpop.permute.xlu0 %819
  %821 = vrot.lane.b32.xlu0 %v804, 33
  %v822 = vpop.permute.xlu0 %821
  %823 = vrot.lane.b32.xlu0 %v807, 33
  %v824 = vpop.permute.xlu0 %823
  %vm825 = vcmask 269312
  %v826 = vsel %vm825, %v810, %v812
  %v827 = vsel %vm825, %v812, %v814
  %v828 = vsel %vm825, %v814, %v816
  %v829 = vsel %vm825, %v818, %v820
  %v830 = vsel %vm825, %v820, %v822
  %v831 = vsel %vm825, %v822, %v824
  %v842 = vsel %vm825, 0.0, %v810
  %v843 = vsel %vm825, 0.0, %v818
  %v844 = vmul.f32 %v64, %v842
  %v845 = vmul.f32 %v65, %v826
  %v846 = vmul.f32 %v66, %v827
  %v847 = vmul.f32 %v67, %v828
  %v848 = vmul.f32 %v68, %v816
  %v849 = vmul.f32 %v64, %v843
  %v850 = vmul.f32 %v65, %v829
  %v851 = vmul.f32 %v66, %v830
  %v852 = vmul.f32 %v67, %v831
  %v853 = vmul.f32 %v68, %v824
  %v854 = vadd.f32 %v610, %v844
  %v855 = vadd.f32 %v612, %v845
  %v856 = vadd.f32 %v693, %v846
  %v857 = vadd.f32 %v695, %v847
  %v858 = vadd.f32 %v776, %v848
  %v859 = vadd.f32 %v616, %v849
  %v860 = vadd.f32 %v618, %v850
  %v861 = vadd.f32 %v699, %v851
  %v862 = vadd.f32 %v701, %v852
  %v863 = vadd.f32 %v781, %v853
  %v869 = vrot.slane %v854, 4
  %v870 = vrot.slane %v855, 4
  %v871 = vrot.slane %v856, 4
  %v872 = vrot.slane %v857, 4
  %v873 = vrot.slane %v858, 4
  %874 = vrot.lane.b32.xlu0 %v869, 1
  %v875 = vpop.permute.xlu0 %874
  %876 = vrot.lane.b32.xlu0 %v870, 1
  %v877 = vpop.permute.xlu0 %876
  %878 = vrot.lane.b32.xlu0 %v871, 1
  %v879 = vpop.permute.xlu0 %878
  %880 = vrot.lane.b32.xlu0 %v872, 1
  %v881 = vpop.permute.xlu0 %880
  %882 = vrot.lane.b32.xlu0 %v873, 1
  %v883 = vpop.permute.xlu0 %882
  %vm884 = vcmask 7168
  %v885 = vsel %vm884, %v875, %v877
  %v886 = vsel %vm884, %v877, %v879
  %v887 = vsel %vm884, %v879, %v881
  %v888 = vsel %vm884, %v881, %v883
  %v894 = vsel %vm884, 0.0, %v875
  %v895 = vadd.f32 %v854, %v894
  %v896 = vadd.f32 %v855, %v885
  %v897 = vadd.f32 %v856, %v886
  %v898 = vadd.f32 %v857, %v887
  %v899 = vadd.f32 %v858, %v888
  %905 = vrot.lane.b32.xlu0 %v859, 2
  %v906 = vpop.permute.xlu0 %905
  %907 = vrot.lane.b32.xlu0 %v860, 2
  %v908 = vpop.permute.xlu0 %907
  %909 = vrot.lane.b32.xlu0 %v861, 2
  %v910 = vpop.permute.xlu0 %909
  %911 = vrot.lane.b32.xlu0 %v862, 2
  %v912 = vpop.permute.xlu0 %911
  %913 = vrot.lane.b32.xlu0 %v863, 2
  %v914 = vpop.permute.xlu0 %913
  %vm915 = vcmask 15360
  %v916 = vsel %vm915, %v906, %v908
  %v917 = vsel %vm915, %v908, %v910
  %v918 = vsel %vm915, %v910, %v912
  %v919 = vsel %vm915, %v912, %v914
  %v925 = vsel %vm915, 0.0, %v906
  %v926 = vadd.f32 %v895, %v925
  %v927 = vadd.f32 %v896, %v916
  %v928 = vadd.f32 %v897, %v917
  %v929 = vadd.f32 %v898, %v918
  %v930 = vadd.f32 %v899, %v919
  %932 = vset.pattern.permute.xlu0 0
  %933 = vperm.xlu0 %932, %v22
  %v934 = vpop.permute.xlu0 %933
  %v936 = vadd.f32 %v926, %v934
  %v937 = vadd.f32 %v927, %v934
  %v938 = vadd.f32 %v928, %v934
  %v939 = vadd.f32 %v929, %v934
  %v940 = vadd.f32 %v930, %v934
  %v941 = vsel %vm796, %v936, 0.0
  %v942 = vrot.slane %v941, 4
  %v943 = vadd.f32 %v941, %v942
  %v944 = vrot.slane %v943, 2
  %v945 = vadd.f32 %v943, %v944
  %v946 = vrot.slane %v945, 1
  %v947 = vadd.f32 %v945, %v946
  %v948 = vsel %vm796, %v937, 0.0
  %v949 = vrot.slane %v948, 4
  %v950 = vadd.f32 %v948, %v949
  %v951 = vrot.slane %v950, 2
  %v952 = vadd.f32 %v950, %v951
  %v953 = vrot.slane %v952, 1
  %v954 = vadd.f32 %v952, %v953
  %v955 = vsel %vm796, %v938, 0.0
  %v956 = vrot.slane %v955, 4
  %v957 = vadd.f32 %v955, %v956
  %v958 = vrot.slane %v957, 2
  %v959 = vadd.f32 %v957, %v958
  %v960 = vrot.slane %v959, 1
  %v961 = vadd.f32 %v959, %v960
  %v962 = vsel %vm796, %v939, 0.0
  %v963 = vrot.slane %v962, 4
  %v964 = vadd.f32 %v962, %v963
  %v965 = vrot.slane %v964, 2
  %v966 = vadd.f32 %v964, %v965
  %v967 = vrot.slane %v966, 1
  %v968 = vadd.f32 %v966, %v967
  %vm969 = vcmask 125952
  %v970 = vsel %vm969, %v940, 0.0
  %v971 = vrot.slane %v970, 4
  %v972 = vadd.f32 %v970, %v971
  %v973 = vrot.slane %v972, 2
  %v974 = vadd.f32 %v972, %v973
  %v975 = vrot.slane %v974, 1
  %v976 = vadd.f32 %v974, %v975
  %v977 = vmul.f32 %v936, %v936
  %v978 = vmul.f32 %v937, %v937
  %v979 = vmul.f32 %v938, %v938
  %v980 = vmul.f32 %v939, %v939
  %v981 = vmul.f32 %v940, %v940
  %v982 = vsel %vm796, %v977, 0.0
  %v983 = vrot.slane %v982, 4
  %v984 = vadd.f32 %v982, %v983
  %v985 = vrot.slane %v984, 2
  %v986 = vadd.f32 %v984, %v985
  %v987 = vrot.slane %v986, 1
  %v988 = vadd.f32 %v986, %v987
  %v989 = vsel %vm796, %v978, 0.0
  %v990 = vrot.slane %v989, 4
  %v991 = vadd.f32 %v989, %v990
  %v992 = vrot.slane %v991, 2
  %v993 = vadd.f32 %v991, %v992
  %v994 = vrot.slane %v993, 1
  %v995 = vadd.f32 %v993, %v994
  %v996 = vsel %vm796, %v979, 0.0
  %v997 = vrot.slane %v996, 4
  %v998 = vadd.f32 %v996, %v997
  %v999 = vrot.slane %v998, 2
  %v1000 = vadd.f32 %v998, %v999
  %v1001 = vrot.slane %v1000, 1
  %v1002 = vadd.f32 %v1000, %v1001
  %v1003 = vsel %vm796, %v980, 0.0
  %v1004 = vrot.slane %v1003, 4
  %v1005 = vadd.f32 %v1003, %v1004
  %v1006 = vrot.slane %v1005, 2
  %v1007 = vadd.f32 %v1005, %v1006
  %v1008 = vrot.slane %v1007, 1
  %v1009 = vadd.f32 %v1007, %v1008
  %v1010 = vsel %vm969, %v981, 0.0
  %v1011 = vrot.slane %v1010, 4
  %v1012 = vadd.f32 %v1010, %v1011
  %v1013 = vrot.slane %v1012, 2
  %v1014 = vadd.f32 %v1012, %v1013
  %v1015 = vrot.slane %v1014, 1
  %v1016 = vadd.f32 %v1014, %v1015
  %vm1017 = vcmask 1040384
  %v1018 = vsel %vm1017, %v947, %v988
  %v1019 = vsel %vm1017, %v954, %v995
  %v1020 = vsel %vm1017, %v961, %v1002
  %v1021 = vsel %vm1017, %v968, %v1009
  %v1022 = vsel %vm1017, %v976, %v1016
  %vm1023 = vcmask 130048
  %v1025 = vsel %vm1023, %v1022, 0
  %1027 = vmatprep.subr.mxu0 0.0
  %1028 = vmatpush1.msra.mxu0 %v419
  %1029 = vmatprep.subr.mxu0 0.0
  %1030 = vmatpush1.msra.mxu0 %v418
  %1031 = vmatprep.subr.mxu0 0.0
  %1032 = vmatpush1.msra.mxu0 %v417
  %1033 = vmatprep.subr.mxu0 0.0
  %1034 = vmatpush1.msra.mxu0 %v416
  %1035 = vmatprep.subr.mxu0 0.0
  %1036 = vmatpush1.msra.mxu0 %v415
  %1037 = vmatprep.subr.mxu0 0.0
  %1038 = vmatpush1.msra.mxu0 %v414
  %1039 = vmatprep.subr.mxu0 0.0
  %1040 = vmatpush1.msra.mxu0 %v413
  %1041 = vmatprep.subr.mxu0 0.0
  %1042 = vmatpush1.msra.mxu0 %v412
  %1043 = vmatprep.subr.mxu0 0.0
  %1044 = vmatpush1.msra.mxu0 %v411
  %1045 = vmatprep.subr.mxu0 0.0
  %1046 = vmatpush1.msra.mxu0 %v410
  %1047 = vmatprep.subr.mxu0 0.0
  %1048 = vmatpush1.msra.mxu0 %v409
  %1049 = vmatprep.subr.mxu0 0.0
  %1050 = vmatpush1.msra.mxu0 %v408
  %1051 = vmatprep.subr.mxu0 0.0
  %1052 = vmatpush1.msra.mxu0 %v407
  %1053 = vmatprep.subr.mxu0 0.0
  %1054 = vmatpush1.msra.mxu0 %v406
  %1055 = vmatprep.subr.mxu0 0.0
  %1056 = vmatpush1.msra.mxu0 %v405
  %1057 = vmatprep.subr.mxu0 0.0
  %1058 = vmatpush1.msra.mxu0 %v404
  %1059 = vmatprep.subr.mxu0 0.0
  %1060 = vmatpush2.msra.mxu0 %v435
  %1061 = vmatprep.subr.mxu0 0.0
  %1062 = vmatpush2.msra.mxu0 %v434
  %1063 = vmatprep.subr.mxu0 0.0
  %1064 = vmatpush2.msra.mxu0 %v433
  %1065 = vmatprep.subr.mxu0 0.0
  %1066 = vmatpush2.msra.mxu0 %v432
  %1067 = vmatprep.subr.mxu0 0.0
  %1068 = vmatpush2.msra.mxu0 %v431
  %1069 = vmatprep.subr.mxu0 0.0
  %1070 = vmatpush2.msra.mxu0 %v430
  %1071 = vmatprep.subr.mxu0 0.0
  %1072 = vmatpush2.msra.mxu0 %v429
  %1073 = vmatprep.subr.mxu0 0.0
  %1074 = vmatpush2.msra.mxu0 %v428
  %1075 = vmatprep.subr.mxu0 0.0
  %1076 = vmatpush2.msra.mxu0 %v427
  %1077 = vmatprep.subr.mxu0 0.0
  %1078 = vmatpush2.msra.mxu0 %v426
  %1079 = vmatprep.subr.mxu0 0.0
  %1080 = vmatpush2.msra.mxu0 %v425
  %1081 = vmatprep.subr.mxu0 0.0
  %1082 = vmatpush2.msra.mxu0 %v424
  %1083 = vmatprep.subr.mxu0 0.0
  %1084 = vmatpush2.msra.mxu0 %v423
  %1085 = vmatprep.subr.mxu0 0.0
  %1086 = vmatpush2.msra.mxu0 %v422
  %1087 = vmatprep.subr.mxu0 0.0
  %1088 = vmatpush2.msra.mxu0 %v421
  %1089 = vmatprep.subr.mxu0 0.0
  %1090 = vmatpush2.msra.mxu0 %v420
  %1091 = vmatprep.mubr.f32.mxu0 %v1019
  %1092 = vmatmul.mubr.f32.gmra.mxu0 %v1018
  %v1093 = vpop.f32.mrf.mxu0
  %v1094 = vadd.f32 0.0, %v1093
  %v1095 = vpop.f32.mrf.mxu0
  %1096 = vdwg.mxu0
  %1097 = vmatprep.subr.mxu0 0.0
  %1098 = vmatpush1.msra.mxu0 %v451
  %1099 = vmatprep.subr.mxu0 0.0
  %1100 = vmatpush1.msra.mxu0 %v450
  %1101 = vmatprep.subr.mxu0 0.0
  %1102 = vmatpush1.msra.mxu0 %v449
  %1103 = vmatprep.subr.mxu0 0.0
  %1104 = vmatpush1.msra.mxu0 %v448
  %1105 = vmatprep.subr.mxu0 0.0
  %1106 = vmatpush1.msra.mxu0 %v447
  %1107 = vmatprep.subr.mxu0 0.0
  %1108 = vmatpush1.msra.mxu0 %v446
  %1109 = vmatprep.subr.mxu0 0.0
  %1110 = vmatpush1.msra.mxu0 %v445
  %1111 = vmatprep.subr.mxu0 0.0
  %1112 = vmatpush1.msra.mxu0 %v444
  %1113 = vmatprep.subr.mxu0 0.0
  %1114 = vmatpush1.msra.mxu0 %v443
  %1115 = vmatprep.subr.mxu0 0.0
  %1116 = vmatpush1.msra.mxu0 %v442
  %1117 = vmatprep.subr.mxu0 0.0
  %1118 = vmatpush1.msra.mxu0 %v441
  %1119 = vmatprep.subr.mxu0 0.0
  %1120 = vmatpush1.msra.mxu0 %v440
  %1121 = vmatprep.subr.mxu0 0.0
  %1122 = vmatpush1.msra.mxu0 %v439
  %1123 = vmatprep.subr.mxu0 0.0
  %1124 = vmatpush1.msra.mxu0 %v438
  %1125 = vmatprep.subr.mxu0 0.0
  %1126 = vmatpush1.msra.mxu0 %v437
  %1127 = vmatprep.subr.mxu0 0.0
  %1128 = vmatpush1.msra.mxu0 %v436
  %1129 = vmatprep.subr.mxu0 0.0
  %1130 = vmatpush2.msra.mxu0 %v467
  %1131 = vmatprep.subr.mxu0 0.0
  %1132 = vmatpush2.msra.mxu0 %v466
  %1133 = vmatprep.subr.mxu0 0.0
  %1134 = vmatpush2.msra.mxu0 %v465
  %1135 = vmatprep.subr.mxu0 0.0
  %1136 = vmatpush2.msra.mxu0 %v464
  %1137 = vmatprep.subr.mxu0 0.0
  %1138 = vmatpush2.msra.mxu0 %v463
  %1139 = vmatprep.subr.mxu0 0.0
  %1140 = vmatpush2.msra.mxu0 %v462
  %1141 = vmatprep.subr.mxu0 0.0
  %1142 = vmatpush2.msra.mxu0 %v461
  %1143 = vmatprep.subr.mxu0 0.0
  %1144 = vmatpush2.msra.mxu0 %v460
  %1145 = vmatprep.subr.mxu0 0.0
  %1146 = vmatpush2.msra.mxu0 %v459
  %1147 = vmatprep.subr.mxu0 0.0
  %1148 = vmatpush2.msra.mxu0 %v458
  %1149 = vmatprep.subr.mxu0 0.0
  %1150 = vmatpush2.msra.mxu0 %v457
  %1151 = vmatprep.subr.mxu0 0.0
  %1152 = vmatpush2.msra.mxu0 %v456
  %1153 = vmatprep.subr.mxu0 0.0
  %1154 = vmatpush2.msra.mxu0 %v455
  %1155 = vmatprep.subr.mxu0 0.0
  %1156 = vmatpush2.msra.mxu0 %v454
  %1157 = vmatprep.subr.mxu0 0.0
  %1158 = vmatpush2.msra.mxu0 %v453
  %1159 = vmatprep.subr.mxu0 0.0
  %1160 = vmatpush2.msra.mxu0 %v452
  %1161 = vmatprep.mubr.f32.mxu0 %v1021
  %1162 = vmatmul.mubr.f32.gmra.mxu0 %v1020
  %v1163 = vpop.f32.mrf.mxu0
  %v1164 = vadd.f32 %v1094, %v1163
  %v1165 = vpop.f32.mrf.mxu0
  %1166 = vdwg.mxu0
  %1167 = vmatprep.subr.mxu0 0.0
  %1168 = vmatpush1.msra.mxu0 0.0
  %1169 = vmatprep.subr.mxu0 0.0
  %1170 = vmatpush1.msra.mxu0 0.0
  %1171 = vmatprep.subr.mxu0 0.0
  %1172 = vmatpush1.msra.mxu0 0.0
  %1173 = vmatprep.subr.mxu0 0.0
  %1174 = vmatpush1.msra.mxu0 0.0
  %1175 = vmatprep.subr.mxu0 0.0
  %1176 = vmatpush1.msra.mxu0 0.0
  %1177 = vmatprep.subr.mxu0 0.0
  %1178 = vmatpush1.msra.mxu0 0.0
  %1179 = vmatprep.subr.mxu0 0.0
  %1180 = vmatpush1.msra.mxu0 0.0
  %1181 = vmatprep.subr.mxu0 0.0
  %1182 = vmatpush1.msra.mxu0 0.0
  %1183 = vmatprep.subr.mxu0 0.0
  %1184 = vmatpush1.msra.mxu0 0.0
  %1185 = vmatprep.subr.mxu0 0.0
  %1186 = vmatpush1.msra.mxu0 0.0
  %1187 = vmatprep.subr.mxu0 0.0
  %1188 = vmatpush1.msra.mxu0 0.0
  %1189 = vmatprep.subr.mxu0 0.0
  %1190 = vmatpush1.msra.mxu0 0.0
  %1191 = vmatprep.subr.mxu0 0.0
  %1192 = vmatpush1.msra.mxu0 0.0
  %1193 = vmatprep.subr.mxu0 0.0
  %1194 = vmatpush1.msra.mxu0 0.0
  %1195 = vmatprep.subr.mxu0 0.0
  %1196 = vmatpush1.msra.mxu0 %v469
  %1197 = vmatprep.subr.mxu0 0.0
  %1198 = vmatpush1.msra.mxu0 %v468
  %1199 = vmatprep.subr.mxu0 0.0
  %1200 = vmatpush2.msra.mxu0 0.0
  %1201 = vmatprep.subr.mxu0 0.0
  %1202 = vmatpush2.msra.mxu0 0.0
  %1203 = vmatprep.subr.mxu0 0.0
  %1204 = vmatpush2.msra.mxu0 0.0
  %1205 = vmatprep.subr.mxu0 0.0
  %1206 = vmatpush2.msra.mxu0 0.0
  %1207 = vmatprep.subr.mxu0 0.0
  %1208 = vmatpush2.msra.mxu0 0.0
  %1209 = vmatprep.subr.mxu0 0.0
  %1210 = vmatpush2.msra.mxu0 0.0
  %1211 = vmatprep.subr.mxu0 0.0
  %1212 = vmatpush2.msra.mxu0 0.0
  %1213 = vmatprep.subr.mxu0 0.0
  %1214 = vmatpush2.msra.mxu0 0.0
  %1215 = vmatprep.subr.mxu0 0.0
  %1216 = vmatpush2.msra.mxu0 0.0
  %1217 = vmatprep.subr.mxu0 0.0
  %1218 = vmatpush2.msra.mxu0 0.0
  %1219 = vmatprep.subr.mxu0 0.0
  %1220 = vmatpush2.msra.mxu0 0.0
  %1221 = vmatprep.subr.mxu0 0.0
  %1222 = vmatpush2.msra.mxu0 0.0
  %1223 = vmatprep.subr.mxu0 0.0
  %1224 = vmatpush2.msra.mxu0 0.0
  %1225 = vmatprep.subr.mxu0 0.0
  %1226 = vmatpush2.msra.mxu0 0.0
  %1227 = vmatprep.subr.mxu0 0.0
  %1228 = vmatpush2.msra.mxu0 0.0
  %1229 = vmatprep.subr.mxu0 0.0
  %1230 = vmatpush2.msra.mxu0 0.0
  %1231 = vmatprep.mubr.f32.mxu0 0.0
  %1232 = vmatmul.mubr.f32.gmra.mxu0 %v1025
  %v1233 = vpop.f32.mrf.mxu0
  %v1234 = vadd.f32 %v1164, %v1233
  %v1235 = vpop.f32.mrf.mxu0
  %1236 = vdwg.mxu0
  %v1237 = vmul.f32 %v1234, %v532
  %v1238 = vmul.f32 %v1237, 2.0
  %v1239 = vmul.f32 %v1238, %v1234
  %v1241 = vrot.slane %v1239, 7
  %v1243 = vsub.f32 %v1234, %v1241
  %v1244 = vmul.f32 %v1243, %v532
  %v1245 = vmul.f32 %v1237, %v1237
  %v1247 = vrot.slane %v1245, 7
  %v1249 = vadd.f32 %v1244, %v1247
  %v1250 = vadd.f32 %v1249, 1e-05
  %v1251 = vrsqrt.pop %v1250
  %v1252 = vsel %vm1017, %v1237, %v1251
  %v1254 = vsel %vm1023, %v1252, 0
  %1256 = vmatprep.subr.mxu0 0.0
  %1257 = vmatpush1.msra.mxu0 0.0
  %1258 = vmatprep.subr.mxu0 0.0
  %1259 = vmatpush1.msra.mxu0 0.0
  %1260 = vmatprep.subr.mxu0 0.0
  %1261 = vmatpush1.msra.mxu0 0.0
  %1262 = vmatprep.subr.mxu0 0.0
  %1263 = vmatpush1.msra.mxu0 0.0
  %1264 = vmatprep.subr.mxu0 0.0
  %1265 = vmatpush1.msra.mxu0 0.0
  %1266 = vmatprep.subr.mxu0 0.0
  %1267 = vmatpush1.msra.mxu0 0.0
  %1268 = vmatprep.subr.mxu0 0.0
  %1269 = vmatpush1.msra.mxu0 0.0
  %1270 = vmatprep.subr.mxu0 0.0
  %1271 = vmatpush1.msra.mxu0 0.0
  %1272 = vmatprep.subr.mxu0 0.0
  %1273 = vmatpush1.msra.mxu0 0.0
  %1274 = vmatprep.subr.mxu0 0.0
  %1275 = vmatpush1.msra.mxu0 0.0
  %1276 = vmatprep.subr.mxu0 0.0
  %1277 = vmatpush1.msra.mxu0 0.0
  %1278 = vmatprep.subr.mxu0 0.0
  %1279 = vmatpush1.msra.mxu0 0.0
  %1280 = vmatprep.subr.mxu0 0.0
  %1281 = vmatpush1.msra.mxu0 0.0
  %1282 = vmatprep.subr.mxu0 0.0
  %1283 = vmatpush1.msra.mxu0 0.0
  %1284 = vmatprep.subr.mxu0 %v522
  %1285 = vmatpush1.msra.mxu0 %v521
  %1286 = vmatprep.subr.mxu0 %v517
  %1287 = vmatpush1.msra.mxu0 %v516
  %1288 = vmatprep.subr.mxu0 0.0
  %1289 = vmatpush2.msra.mxu0 0.0
  %1290 = vmatprep.subr.mxu0 0.0
  %1291 = vmatpush2.msra.mxu0 0.0
  %1292 = vmatprep.subr.mxu0 0.0
  %1293 = vmatpush2.msra.mxu0 0.0
  %1294 = vmatprep.subr.mxu0 0.0
  %1295 = vmatpush2.msra.mxu0 0.0
  %1296 = vmatprep.subr.mxu0 0.0
  %1297 = vmatpush2.msra.mxu0 0.0
  %1298 = vmatprep.subr.mxu0 0.0
  %1299 = vmatpush2.msra.mxu0 0.0
  %1300 = vmatprep.subr.mxu0 0.0
  %1301 = vmatpush2.msra.mxu0 0.0
  %1302 = vmatprep.subr.mxu0 0.0
  %1303 = vmatpush2.msra.mxu0 0.0
  %1304 = vmatprep.subr.mxu0 0.0
  %1305 = vmatpush2.msra.mxu0 0.0
  %1306 = vmatprep.subr.mxu0 0.0
  %1307 = vmatpush2.msra.mxu0 0.0
  %1308 = vmatprep.subr.mxu0 0.0
  %1309 = vmatpush2.msra.mxu0 0.0
  %1310 = vmatprep.subr.mxu0 0.0
  %1311 = vmatpush2.msra.mxu0 0.0
  %1312 = vmatprep.subr.mxu0 0.0
  %1313 = vmatpush2.msra.mxu0 0.0
  %1314 = vmatprep.subr.mxu0 0.0
  %1315 = vmatpush2.msra.mxu0 0.0
  %1316 = vmatprep.subr.mxu0 0.0
  %1317 = vmatpush2.msra.mxu0 0.0
  %1318 = vmatprep.subr.mxu0 0.0
  %1319 = vmatpush2.msra.mxu0 0.0
  %1320 = vmatprep.mubr.f32.mxu0 0.0
  %1321 = vmatmul.mubr.f32.gmra.mxu0 %v1254
  %v1322 = vpop.f32.mrf.mxu0
  %v1323 = vadd.f32 0.0, %v1322
  %v1324 = vpop.f32.mrf.mxu0
  %v1325 = vadd.f32 0.0, %v1324
  %1326 = vdwg.mxu0
  %1327 = vmatprep.subr.mxu0 0.0
  %1328 = vmatpush1.msra.mxu0 0.0
  %1329 = vmatprep.subr.mxu0 0.0
  %1330 = vmatpush1.msra.mxu0 0.0
  %1331 = vmatprep.subr.mxu0 0.0
  %1332 = vmatpush1.msra.mxu0 0.0
  %1333 = vmatprep.subr.mxu0 0.0
  %1334 = vmatpush1.msra.mxu0 0.0
  %1335 = vmatprep.subr.mxu0 0.0
  %1336 = vmatpush1.msra.mxu0 0.0
  %1337 = vmatprep.subr.mxu0 0.0
  %1338 = vmatpush1.msra.mxu0 0.0
  %1339 = vmatprep.subr.mxu0 0.0
  %1340 = vmatpush1.msra.mxu0 0.0
  %1341 = vmatprep.subr.mxu0 0.0
  %1342 = vmatpush1.msra.mxu0 0.0
  %1343 = vmatprep.subr.mxu0 0.0
  %1344 = vmatpush1.msra.mxu0 0.0
  %1345 = vmatprep.subr.mxu0 0.0
  %1346 = vmatpush1.msra.mxu0 0.0
  %1347 = vmatprep.subr.mxu0 0.0
  %1348 = vmatpush1.msra.mxu0 0.0
  %1349 = vmatprep.subr.mxu0 0.0
  %1350 = vmatpush1.msra.mxu0 0.0
  %1351 = vmatprep.subr.mxu0 0.0
  %1352 = vmatpush1.msra.mxu0 0.0
  %1353 = vmatprep.subr.mxu0 0.0
  %1354 = vmatpush1.msra.mxu0 0.0
  %1355 = vmatprep.subr.mxu0 %v524
  %1356 = vmatpush1.msra.mxu0 %v523
  %1357 = vmatprep.subr.mxu0 %v519
  %1358 = vmatpush1.msra.mxu0 %v518
  %1359 = vmatprep.subr.mxu0 0.0
  %1360 = vmatpush2.msra.mxu0 0.0
  %1361 = vmatprep.subr.mxu0 0.0
  %1362 = vmatpush2.msra.mxu0 0.0
  %1363 = vmatprep.subr.mxu0 0.0
  %1364 = vmatpush2.msra.mxu0 0.0
  %1365 = vmatprep.subr.mxu0 0.0
  %1366 = vmatpush2.msra.mxu0 0.0
  %1367 = vmatprep.subr.mxu0 0.0
  %1368 = vmatpush2.msra.mxu0 0.0
  %1369 = vmatprep.subr.mxu0 0.0
  %1370 = vmatpush2.msra.mxu0 0.0
  %1371 = vmatprep.subr.mxu0 0.0
  %1372 = vmatpush2.msra.mxu0 0.0
  %1373 = vmatprep.subr.mxu0 0.0
  %1374 = vmatpush2.msra.mxu0 0.0
  %1375 = vmatprep.subr.mxu0 0.0
  %1376 = vmatpush2.msra.mxu0 0.0
  %1377 = vmatprep.subr.mxu0 0.0
  %1378 = vmatpush2.msra.mxu0 0.0
  %1379 = vmatprep.subr.mxu0 0.0
  %1380 = vmatpush2.msra.mxu0 0.0
  %1381 = vmatprep.subr.mxu0 0.0
  %1382 = vmatpush2.msra.mxu0 0.0
  %1383 = vmatprep.subr.mxu0 0.0
  %1384 = vmatpush2.msra.mxu0 0.0
  %1385 = vmatprep.subr.mxu0 0.0
  %1386 = vmatpush2.msra.mxu0 0.0
  %1387 = vmatprep.subr.mxu0 0.0
  %1388 = vmatpush2.msra.mxu0 0.0
  %1389 = vmatprep.subr.mxu0 0.0
  %1390 = vmatpush2.msra.mxu0 0.0
  %1391 = vmatprep.mubr.f32.mxu0 0.0
  %1392 = vmatmul.mubr.f32.gmra.mxu0 %v1254
  %v1393 = vpop.f32.mrf.mxu0
  %v1394 = vadd.f32 0.0, %v1393
  %v1395 = vpop.f32.mrf.mxu0
  %v1396 = vadd.f32 0.0, %v1395
  %1397 = vdwg.mxu0
  %1398 = vmatprep.subr.mxu0 0.0
  %1399 = vmatpush1.msra.mxu0 0.0
  %1400 = vmatprep.subr.mxu0 0.0
  %1401 = vmatpush1.msra.mxu0 0.0
  %1402 = vmatprep.subr.mxu0 0.0
  %1403 = vmatpush1.msra.mxu0 0.0
  %1404 = vmatprep.subr.mxu0 0.0
  %1405 = vmatpush1.msra.mxu0 0.0
  %1406 = vmatprep.subr.mxu0 0.0
  %1407 = vmatpush1.msra.mxu0 0.0
  %1408 = vmatprep.subr.mxu0 0.0
  %1409 = vmatpush1.msra.mxu0 0.0
  %1410 = vmatprep.subr.mxu0 0.0
  %1411 = vmatpush1.msra.mxu0 0.0
  %1412 = vmatprep.subr.mxu0 0.0
  %1413 = vmatpush1.msra.mxu0 0.0
  %1414 = vmatprep.subr.mxu0 0.0
  %1415 = vmatpush1.msra.mxu0 0.0
  %1416 = vmatprep.subr.mxu0 0.0
  %1417 = vmatpush1.msra.mxu0 0.0
  %1418 = vmatprep.subr.mxu0 0.0
  %1419 = vmatpush1.msra.mxu0 0.0
  %1420 = vmatprep.subr.mxu0 0.0
  %1421 = vmatpush1.msra.mxu0 0.0
  %1422 = vmatprep.subr.mxu0 0.0
  %1423 = vmatpush1.msra.mxu0 0.0
  %1424 = vmatprep.subr.mxu0 0.0
  %1425 = vmatpush1.msra.mxu0 0.0
  %1426 = vmatprep.subr.mxu0 0.0
  %1427 = vmatpush1.msra.mxu0 %v525
  %1428 = vmatprep.subr.mxu0 0.0
  %1429 = vmatpush1.msra.mxu0 %v520
  %1430 = vmatprep.subr.mxu0 0.0
  %1431 = vmatpush2.msra.mxu0 0.0
  %1432 = vmatprep.subr.mxu0 0.0
  %1433 = vmatpush2.msra.mxu0 0.0
  %1434 = vmatprep.subr.mxu0 0.0
  %1435 = vmatpush2.msra.mxu0 0.0
  %1436 = vmatprep.subr.mxu0 0.0
  %1437 = vmatpush2.msra.mxu0 0.0
  %1438 = vmatprep.subr.mxu0 0.0
  %1439 = vmatpush2.msra.mxu0 0.0
  %1440 = vmatprep.subr.mxu0 0.0
  %1441 = vmatpush2.msra.mxu0 0.0
  %1442 = vmatprep.subr.mxu0 0.0
  %1443 = vmatpush2.msra.mxu0 0.0
  %1444 = vmatprep.subr.mxu0 0.0
  %1445 = vmatpush2.msra.mxu0 0.0
  %1446 = vmatprep.subr.mxu0 0.0
  %1447 = vmatpush2.msra.mxu0 0.0
  %1448 = vmatprep.subr.mxu0 0.0
  %1449 = vmatpush2.msra.mxu0 0.0
  %1450 = vmatprep.subr.mxu0 0.0
  %1451 = vmatpush2.msra.mxu0 0.0
  %1452 = vmatprep.subr.mxu0 0.0
  %1453 = vmatpush2.msra.mxu0 0.0
  %1454 = vmatprep.subr.mxu0 0.0
  %1455 = vmatpush2.msra.mxu0 0.0
  %1456 = vmatprep.subr.mxu0 0.0
  %1457 = vmatpush2.msra.mxu0 0.0
  %1458 = vmatprep.subr.mxu0 0.0
  %1459 = vmatpush2.msra.mxu0 0.0
  %1460 = vmatprep.subr.mxu0 0.0
  %1461 = vmatpush2.msra.mxu0 0.0
  %1462 = vmatprep.mubr.f32.mxu0 0.0
  %1463 = vmatmul.mubr.f32.gmra.mxu0 %v1254
  %v1464 = vpop.f32.mrf.mxu0
  %v1465 = vadd.f32 0.0, %v1464
  %v1466 = vpop.f32.mrf.mxu0
  %1467 = vdwg.mxu0
  %v1468 = vlaneseq
  %v1469 = vshrl.u32 %v1468, 7
  %v1470 = vsub.s32 0, %v1469
  %v1471 = vrot.slane %v1323, %v1470
  %v1472 = vlaneseq
  %v1473 = vshrl.u32 %v1472, 7
  %v1474 = vsub.s32 0, %v1473
  %v1475 = vrot.slane %v1325, %v1474
  %v1476 = vlaneseq
  %v1477 = vshrl.u32 %v1476, 7
  %v1478 = vsub.s32 0, %v1477
  %v1479 = vrot.slane %v1394, %v1478
  %v1480 = vlaneseq
  %v1481 = vshrl.u32 %v1480, 7
  %v1482 = vsub.s32 0, %v1481
  %v1483 = vrot.slane %v1396, %v1482
  %v1484 = vlaneseq
  %v1485 = vshrl.u32 %v1484, 7
  %v1486 = vsub.s32 0, %v1485
  %v1487 = vrot.slane %v1465, %v1486
  %v1488 = vsub.f32 %v936, %v1471
  %v1489 = vsub.f32 %v937, %v1475
  %v1490 = vsub.f32 %v938, %v1479
  %v1491 = vsub.f32 %v939, %v1483
  %v1492 = vsub.f32 %v940, %v1487
  %v1493 = vlaneseq
  %v1494 = vshrl.u32 %v1493, 7
  %v1495 = vsub.s32 1, %v1494
  %v1496 = vrot.slane %v1323, %v1495
  %v1497 = vlaneseq
  %v1498 = vshrl.u32 %v1497, 7
  %v1499 = vsub.s32 1, %v1498
  %v1500 = vrot.slane %v1325, %v1499
  %v1501 = vlaneseq
  %v1502 = vshrl.u32 %v1501, 7
  %v1503 = vsub.s32 1, %v1502
  %v1504 = vrot.slane %v1394, %v1503
  %v1505 = vlaneseq
  %v1506 = vshrl.u32 %v1505, 7
  %v1507 = vsub.s32 1, %v1506
  %v1508 = vrot.slane %v1396, %v1507
  %v1509 = vlaneseq
  %v1510 = vshrl.u32 %v1509, 7
  %v1511 = vsub.s32 1, %v1510
  %v1512 = vrot.slane %v1465, %v1511
  %1513 = vset.pattern.permute.xlu0 1
  %1514 = vperm.xlu0 %1513, %v22
  %v1515 = vpop.permute.xlu0 %1514
  %v1517 = vmul.f32 %v1496, %v1515
  %v1518 = vmul.f32 %v1500, %v1515
  %v1519 = vmul.f32 %v1504, %v1515
  %v1520 = vmul.f32 %v1508, %v1515
  %v1521 = vmul.f32 %v1512, %v1515
  %v1522 = vmul.f32 %v1488, %v1517
  %v1523 = vmul.f32 %v1489, %v1518
  %v1524 = vmul.f32 %v1490, %v1519
  %v1525 = vmul.f32 %v1491, %v1520
  %v1526 = vmul.f32 %v1492, %v1521
  %1527 = vset.pattern.permute.xlu0 2
  %1528 = vperm.xlu0 %1527, %v22
  %v1529 = vpop.permute.xlu0 %1528
  %v1531 = vadd.f32 %v1522, %v1529
  %v1532 = vadd.f32 %v1523, %v1529
  %v1533 = vadd.f32 %v1524, %v1529
  %v1534 = vadd.f32 %v1525, %v1529
  %v1535 = vadd.f32 %v1526, %v1529
  %vm1536 = vcmp.ge.f32.partialorder %v1531, 0.0
  %vm1537 = vcmp.ge.f32.partialorder %v1532, 0.0
  %vm1538 = vcmp.ge.f32.partialorder %v1533, 0.0
  %vm1539 = vcmp.ge.f32.partialorder %v1534, 0.0
  %vm1540 = vcmp.ge.f32.partialorder %v1535, 0.0
  %1541 = vset.pattern.permute.xlu0 3
  %1542 = vperm.xlu0 %1541, %v22
  %v1543 = vpop.permute.xlu0 %1542
  %v1545 = vmul.f32 %v1543, %v1531
  %v1546 = vmul.f32 %v1543, %v1532
  %v1547 = vmul.f32 %v1543, %v1533
  %v1548 = vmul.f32 %v1543, %v1534
  %v1549 = vmul.f32 %v1543, %v1535
  %v1550 = vsel %vm1536, %v1531, %v1545
  %v1551 = vsel %vm1537, %v1532, %v1546
  %v1552 = vsel %vm1538, %v1533, %v1547
  %v1553 = vsel %vm1539, %v1534, %v1548
  %v1554 = vsel %vm1540, %v1535, %v1549
  %v1559 = vcombine.low %v1550, %v1551
  %v1560 = vcombine.low %v1552, %v1553
  %1563 = vst [vmem:[%s3] sm:$0xff] %v1559
  %1564 = vst [vmem:[%s3 + $0x8] sm:$0xff] %v1560
  %1565 = vst.msk [vmem:[%s3 + $0x10] sm:$0xf] %vm969, %v1554
  // Predicated region
  $region14: #{deconv2d_unit.1} parent=0 // pred_check
    _
  $region15: #{deconv2d_unit.1} parent=0 // pred_check_branch
    %1567 = sbr.rel (0) target = $region17
  $region16: #{deconv2d_unit.1} parent=0 // pred_region
    _
  $region17: #{deconv2d_unit.1} parent=0 // pred_fallthru
    _
  // Predicated region
  $region18: #{deconv2d_unit.1} parent=0 // pred_check
    _
  $region19: #{deconv2d_unit.1} parent=0 // pred_check_branch
    %1569 = sbr.rel (0) target = $region21
  $region20: #{deconv2d_unit.1} parent=0 // pred_region
    _
  $region21: #{deconv2d_unit.1} parent=0 // pred_fallthru
    _

</llo_original>
